<compile_context>
chip_gen: v7x
topology: tpu7x:2x2x1
jax: 0.10.0
libtpu: 0.0.40
codegen_flags: <defaults>
</compile_context>

<pallas_src>
import jax
import jax.numpy as jnp
from jax import lax
from jax.experimental import pallas as pl
from jax.experimental.pallas import tpu as pltpu


_MIN_VMEM_LIMIT = 32 * 2**20


def _vmem_capacity_bytes():
    try:
        info = pltpu.get_tpu_info()
        cap = getattr(info, "vmem_capacity_bytes", None)
        if cap:
            return int(cap)
    except Exception:
        pass
    return 64 * 2**20  # conservative default: v7x per-TensorCore VMEM


def _vmem_budget_bytes():
    # Leave ~20% headroom for Mosaic internal scratch and pipeline buffers.
    return int(_vmem_capacity_bytes() * 0.8)


def _spec(shape, index_map, *, buffers=None):
    """BlockSpec helper; requests explicit buffer depth when supported."""
    if buffers is not None:
        try:
            return pl.BlockSpec(shape, index_map,
                                pipeline_mode=pl.Buffered(buffers))
        except Exception:
            pass  # older jax: fall back to default pipelining
    return pl.BlockSpec(shape, index_map)


def _norm_epilogue(x, out, gamma, beta, out_dtype):
    """Residual + dim=1 normalization (torch.std -> unbiased), all in f32."""
    y = x.astype(jnp.float32) + out                        # (T, H) f32
    hdim = y.shape[1]
    mean = jnp.sum(y, axis=1, keepdims=True) * (1.0 / hdim)
    yc = y - mean                                          # center first (stable)
    var = jnp.sum(yc * yc, axis=1, keepdims=True) * (1.0 / (hdim - 1))
    inv_std = lax.rsqrt(jnp.maximum(var, 0.0))             # EUP rsqrt, no VPU divide
    # TODO(synk): PyTorch normalize() has no eps either -> constant rows give
    # inf/NaN there too; add an eps here only if the module gains one.
    scale = inv_std * gamma                                # fold gamma into the scale
    return (yc * scale + beta).astype(out_dtype)


def _ffn_kernel_resident(x_ref, w1_ref, b1_ref, w2_ref, b2_ref,
                         gamma_ref, beta_ref, o_ref):
    x = x_ref[...]                                         # (tile_n, H)

    # fc[0]: Linear(H -> I) + ReLU. Cast x to the weight dtype so bf16 weights
    # keep the MXU in its fast bf16 mode; accumulate in f32.
    h = jnp.dot(x.astype(w1_ref.dtype), w1_ref[...],
                preferred_element_type=jnp.float32) + b1_ref[...]
    h = jnp.maximum(h, 0.0)

    # fc[2]: Linear(I -> H).
    out = jnp.dot(h.astype(w2_ref.dtype), w2_ref[...],
                  preferred_element_type=jnp.float32) + b2_ref[...]

    # TODO(synk): nn.Dropout is identity in eval mode; training-mode dropout
    # would use pltpu.prng_seed / pltpu.stateful_bernoulli here.

    o_ref[...] = _norm_epilogue(x, out, gamma_ref[...], beta_ref[...],
                                o_ref.dtype)


def _ffn_kernel_itiled(x_ref, w1_ref, b1_ref, w2_ref, b2_ref,
                       gamma_ref, beta_ref, o_ref, acc_ref):
    """Grid (N/tile_n, I/tile_i); I axis is the reduction, acc in f32 scratch."""
    ii = pl.program_id(1)

    @pl.when(ii == 0)
    def _():
        acc_ref[...] = jnp.zeros_like(acc_ref)

    x = x_ref[...]                                         # (tile_n, H)
    # Partial first GEMM over this I slice; ReLU is elementwise per slice so
    # applying it here is exact.
    h = jnp.dot(x.astype(w1_ref.dtype), w1_ref[...],
                preferred_element_type=jnp.float32) + b1_ref[...]
    h = jnp.maximum(h, 0.0)
    acc_ref[...] += jnp.dot(h.astype(w2_ref.dtype), w2_ref[...],
                            preferred_element_type=jnp.float32)

    @pl.when(ii == pl.num_programs(1) - 1)
    def _():
        out = acc_ref[...] + b2_ref[...]
        o_ref[...] = _norm_epilogue(x, out, gamma_ref[...], beta_ref[...],
                                    o_ref.dtype)


def ffn_forward(x, w1_t, b1, w2_t, b2, gamma, beta, *, tile_n=None, tile_i=None):
    """x: (N, H).  w1_t: (H, I) = W1.T,  w2_t: (I, H) = W2.T.

    Weights are expected pre-transposed (done once at parameter-load time).
    tile_i forces the intermediate-dim-tiled path (otherwise chosen
    automatically when the resident weights do not fit the VMEM budget).
    """
    N, H = x.shape
    Hw, I = w1_t.shape
    assert Hw == H and w2_t.shape == (I, H)

    a_bytes = jnp.dtype(x.dtype).itemsize
    w_bytes = jnp.dtype(w1_t.dtype).itemsize
    budget = _vmem_budget_bytes()

    b1_2d = b1.reshape(1, I)
    b2_2d = b2.reshape(1, H)
    gamma_2d = gamma.reshape(1, H)
    beta_2d = beta.reshape(1, H)

    def resident_bytes(tn):
        weights = 2 * H * I * w_bytes + (I + 3 * H) * 4    # Buffered(1): one copy
        streams = (2 + 2) * tn * H * a_bytes               # x + out double buffers
        temps = tn * (I + 2 * H) * 4                       # h / y f32 temporaries
        return weights + streams + temps

    # Pick the N tile: largest 256-aligned (MXU is 2x256^2 on v6e/v7x) divisor
    # of N that fits the budget; 128 is the floor (v5e's 4x128^2 MXU).
    if tile_n is None and tile_i is None:
        for cand in (512, 256, 128):
            if N % cand == 0 and resident_bytes(cand) <= budget:
                tile_n = cand
                break
    if tile_n is None:
        for cand in (512, 256, 128):
            if N % cand == 0:
                tile_n = cand
                break
        else:
            tile_n = N
    tile_n = min(tile_n, N)
    assert N % tile_n == 0, "token count must be a multiple of the N tile"

    use_itiled = (tile_i is not None) or (resident_bytes(tile_n) > budget)

    cost = pl.CostEstimate(
        flops=4 * N * H * I,                               # two GEMMs
        transcendentals=N,                                 # one rsqrt per token row
        bytes_accessed=(2 * N * H * a_bytes                # x in, result out
                        + 2 * H * I * w_bytes              # W1^T, W2^T
                        + (I + 3 * H) * 4),                # biases + gamma/beta
    )

    if not use_itiled:
        vmem_limit = int(min(max(2 * resident_bytes(tile_n), _MIN_VMEM_LIMIT),
                             budget))
        return pl.pallas_call(
            _ffn_kernel_resident,
            out_shape=jax.ShapeDtypeStruct((N, H), x.dtype),
            grid=(N // tile_n,),
            in_specs=[
                _spec((tile_n, H), lambda i: (i, 0)),               # x streamed
                _spec((H, I), lambda i: (0, 0), buffers=1),         # W1^T resident
                _spec((1, I), lambda i: (0, 0), buffers=1),         # b1
                _spec((I, H), lambda i: (0, 0), buffers=1),         # W2^T resident
                _spec((1, H), lambda i: (0, 0), buffers=1),         # b2
                _spec((1, H), lambda i: (0, 0), buffers=1),         # gamma
                _spec((1, H), lambda i: (0, 0), buffers=1),         # beta
            ],
            out_specs=pl.BlockSpec((tile_n, H), lambda i: (i, 0)),
            compiler_params=pltpu.CompilerParams(
                dimension_semantics=("parallel",),
                vmem_limit_bytes=vmem_limit,
            ),
            cost_estimate=cost,
        )(x, w1_t, b1_2d, w2_t, b2_2d, gamma_2d, beta_2d)

    # ---- intermediate-dim (I) tiled path for large H*I weights ----
    if tile_i is None:
        for cand in (2048, 1024, 512, 256, 128):
            if I % cand == 0:
                tile_i = cand
                break
        else:
            tile_i = I
    assert I % tile_i == 0, "intermediate size must be a multiple of the I tile"

    itiled_bytes = (2 * 2 * H * tile_i * w_bytes           # W slices, double buffered
                    + 2 * tile_i * 4 + 3 * H * 4           # b1 slices + b2/gamma/beta
                    + (2 + 2) * tile_n * H * a_bytes       # x / out double buffers
                    + tile_n * H * 4                       # f32 accumulator scratch
                    + tile_n * tile_i * 4)                 # h temporary
    vmem_limit = int(min(max(2 * itiled_bytes, _MIN_VMEM_LIMIT), budget))

    return pl.pallas_call(
        _ffn_kernel_itiled,
        out_shape=jax.ShapeDtypeStruct((N, H), x.dtype),
        grid=(N // tile_n, I // tile_i),
        in_specs=[
            _spec((tile_n, H), lambda n, i: (n, 0)),                # x
            _spec((H, tile_i), lambda n, i: (0, i)),                # W1^T slice
            _spec((1, tile_i), lambda n, i: (0, i)),                # b1 slice
            _spec((tile_i, H), lambda n, i: (i, 0)),                # W2^T slice
            _spec((1, H), lambda n, i: (0, 0), buffers=1),          # b2
            _spec((1, H), lambda n, i: (0, 0), buffers=1),          # gamma
            _spec((1, H), lambda n, i: (0, 0), buffers=1),          # beta
        ],
        out_specs=pl.BlockSpec((tile_n, H), lambda n, i: (n, 0)),
        scratch_shapes=[pltpu.VMEM((tile_n, H), jnp.float32)],
        compiler_params=pltpu.CompilerParams(
            dimension_semantics=("parallel", "arbitrary"),
            vmem_limit_bytes=vmem_limit,
        ),
        cost_estimate=cost,
    )(x, w1_t, b1_2d, w2_t, b2_2d, gamma_2d, beta_2d)


def ffn_reference(x, w1, b1, w2, b2, gamma, beta):
    """Pure-JAX reference mirroring the PyTorch module (eval mode)."""
    hp = lax.Precision.HIGHEST
    h = jnp.maximum(jnp.dot(x, w1.T, precision=hp) + b1, 0.0)
    out = jnp.dot(h, w2.T, precision=hp) + b2
    y = x + out
    mean = jnp.mean(y, axis=1, keepdims=True)
    std = jnp.std(y, axis=1, keepdims=True, ddof=1)        # torch.std is unbiased
    return (y - mean) / std * gamma + beta


if __name__ == "__main__":
    # Small but lane-aligned shapes: batch=8, seq=128 -> N=1024 tokens,
    # hidden=128, intermediate=256 (multiples of 128 -> dense vregs) and a
    # default tile_n of 512 -> 2 grid steps to exercise the pipeline.
    batch, seq = 8, 128
    N, H, I = batch * seq, 128, 256

    key = jax.random.PRNGKey(0)
    kx, kw1, kb1, kw2, kb2 = jax.random.split(key, 5)

    x = jax.random.normal(kx, (N, H), dtype=jnp.float32)

    # Parameters in PyTorch layout (nn.Linear.weight is (out, in)).
    w1 = jax.random.normal(kw1, (I, H), dtype=jnp.float32) * 0.1   # Linear(H, I).weight
    b1 = jax.random.normal(kb1, (I,), dtype=jnp.float32) * 0.1     # Linear(H, I).bias
    w2 = jax.random.normal(kw2, (H, I), dtype=jnp.float32) * 0.1   # Linear(I, H).weight
    b2 = jax.random.normal(kb2, (H,), dtype=jnp.float32) * 0.1     # Linear(I, H).bias
    gamma = jnp.ones((H,), dtype=jnp.float32)                      # nn.Parameter(ones)
    beta = jnp.zeros((H,), dtype=jnp.float32)                      # nn.Parameter(zeros)

    # Transpose once at parameter-load time (not per forward call).
    w1_t = jnp.asarray(w1.T)          # (H, I)
    w2_t = jnp.asarray(w2.T)          # (I, H)

    ref = ffn_reference(x, w1, b1, w2, b2, gamma, beta)

    # 1) Resident-weight path (f32).
    out = jax.block_until_ready(ffn_forward(x, w1_t, b1, w2_t, b2, gamma, beta))
    assert out.shape == (N, H)
    assert jnp.allclose(out, ref, atol=2e-3, rtol=2e-3), "resident path mismatch"

    # 2) I-tiled path (forced) — exercises the accumulator + pl.when epilogue.
    out_it = jax.block_until_ready(
        ffn_forward(x, w1_t, b1, w2_t, b2, gamma, beta, tile_i=128))
    assert jnp.allclose(out_it, ref, atol=2e-3, rtol=2e-3), "I-tiled path mismatch"

    # 3) bf16 GEMM path (bf16 weights/activations, f32 accumulation/epilogue).
    out_bf16 = jax.block_until_ready(
        ffn_forward(x.astype(jnp.bfloat16), w1_t.astype(jnp.bfloat16), b1,
                    w2_t.astype(jnp.bfloat16), b2, gamma, beta))
    assert jnp.allclose(out_bf16.astype(jnp.float32), ref, atol=1e-1, rtol=1e-1), \
        "bf16 path mismatch"

    print("KERNEL_OK")
</pallas_src>

<mosaic_0001>
module attributes {stable_mosaic.version = 11 : i64} {
  func.func @_ffn_kernel_resident(%arg0: i32, %arg1: memref<512x128xf32, #tpu.memory_space<vmem>>, %arg2: memref<128x256xf32, #tpu.memory_space<vmem>>, %arg3: memref<1x256xf32, #tpu.memory_space<vmem>>, %arg4: memref<256x128xf32, #tpu.memory_space<vmem>>, %arg5: memref<1x128xf32, #tpu.memory_space<vmem>>, %arg6: memref<1x128xf32, #tpu.memory_space<vmem>>, %arg7: memref<1x128xf32, #tpu.memory_space<vmem>>, %arg8: memref<512x128xf32, #tpu.memory_space<vmem>>) attributes {dimension_semantics = [#tpu.dimension_semantics<parallel>], iteration_bounds = array<i64: 2>, scalar_prefetch = 0 : i64, scratch_operands = 0 : i64, tpu.core_type = #tpu.core_type<tc>, window_params = [{transform_indices = @transform_0, window_bounds = array<i64: 512, 128>}, {pipeline_mode = #tpu.pipeline_mode<synchronous>, transform_indices = @transform_1, window_bounds = array<i64: 128, 256>}, {pipeline_mode = #tpu.pipeline_mode<synchronous>, transform_indices = @transform_2, window_bounds = array<i64: 1, 256>}, {pipeline_mode = #tpu.pipeline_mode<synchronous>, transform_indices = @transform_3, window_bounds = array<i64: 256, 128>}, {pipeline_mode = #tpu.pipeline_mode<synchronous>, transform_indices = @transform_4, window_bounds = array<i64: 1, 128>}, {pipeline_mode = #tpu.pipeline_mode<synchronous>, transform_indices = @transform_5, window_bounds = array<i64: 1, 128>}, {pipeline_mode = #tpu.pipeline_mode<synchronous>, transform_indices = @transform_6, window_bounds = array<i64: 1, 128>}, {transform_indices = @transform_7, window_bounds = array<i64: 512, 128>}]} {
    %c0 = arith.constant 0 : index
    %c0_0 = arith.constant 0 : index
    %0 = vector.load %arg1[%c0, %c0_0] : memref<512x128xf32, #tpu.memory_space<vmem>>, vector<512x128xf32>
    %c0_1 = arith.constant 0 : index
    %c0_2 = arith.constant 0 : index
    %1 = vector.load %arg2[%c0_1, %c0_2] : memref<128x256xf32, #tpu.memory_space<vmem>>, vector<128x256xf32>
    %cst = arith.constant dense<0.000000e+00> : vector<512x256xf32>
    %2 = tpu.matmul %0, %1, %cst {dimension_numbers = #tpu.dot_dimension_numbers<[1], [0], [0], [1], [0, 0, 1, 1], [], []>} : vector<512x128xf32>, vector<128x256xf32>, vector<512x256xf32> -> vector<512x256xf32>
    %c0_3 = arith.constant 0 : index
    %c0_4 = arith.constant 0 : index
    %3 = vector.load %arg3[%c0_3, %c0_4] : memref<1x256xf32, #tpu.memory_space<vmem>>, vector<1x256xf32>
    %4 = vector.broadcast %3 : vector<1x256xf32> to vector<512x256xf32>
    %5 = arith.addf %2, %4 : vector<512x256xf32>
    %cst_5 = arith.constant 0.000000e+00 : f32
    %6 = vector.broadcast %cst_5 : f32 to vector<512x256xf32>
    %7 = arith.maximumf %5, %6 : vector<512x256xf32>
    %c0_6 = arith.constant 0 : index
    %c0_7 = arith.constant 0 : index
    %8 = vector.load %arg4[%c0_6, %c0_7] : memref<256x128xf32, #tpu.memory_space<vmem>>, vector<256x128xf32>
    %cst_8 = arith.constant dense<0.000000e+00> : vector<512x128xf32>
    %9 = tpu.matmul %7, %8, %cst_8 {dimension_numbers = #tpu.dot_dimension_numbers<[1], [0], [0], [1], [0, 0, 1, 1], [], []>} : vector<512x256xf32>, vector<256x128xf32>, vector<512x128xf32> -> vector<512x128xf32>
    %c0_9 = arith.constant 0 : index
    %c0_10 = arith.constant 0 : index
    %10 = vector.load %arg5[%c0_9, %c0_10] : memref<1x128xf32, #tpu.memory_space<vmem>>, vector<1x128xf32>
    %11 = vector.broadcast %10 : vector<1x128xf32> to vector<512x128xf32>
    %12 = arith.addf %9, %11 : vector<512x128xf32>
    %c0_11 = arith.constant 0 : index
    %c0_12 = arith.constant 0 : index
    %13 = vector.load %arg6[%c0_11, %c0_12] : memref<1x128xf32, #tpu.memory_space<vmem>>, vector<1x128xf32>
    %c0_13 = arith.constant 0 : index
    %c0_14 = arith.constant 0 : index
    %14 = vector.load %arg7[%c0_13, %c0_14] : memref<1x128xf32, #tpu.memory_space<vmem>>, vector<1x128xf32>
    %15 = arith.addf %0, %12 : vector<512x128xf32>
    %cst_15 = arith.constant dense<0.000000e+00> : vector<512xf32>
    %16 = vector.multi_reduction <add>, %15, %cst_15 [1] : vector<512x128xf32> to vector<512xf32>
    %17 = vector.shape_cast %16 : vector<512xf32> to vector<512x1xf32>
    %cst_16 = arith.constant 7.812500e-03 : f32
    %18 = vector.broadcast %cst_16 : f32 to vector<512x1xf32>
    %19 = arith.mulf %17, %18 : vector<512x1xf32>
    %20 = vector.broadcast %19 : vector<512x1xf32> to vector<512x128xf32>
    %21 = arith.subf %15, %20 : vector<512x128xf32>
    %22 = arith.mulf %21, %21 : vector<512x128xf32>
    %cst_17 = arith.constant dense<0.000000e+00> : vector<512xf32>
    %23 = vector.multi_reduction <add>, %22, %cst_17 [1] : vector<512x128xf32> to vector<512xf32>
    %24 = vector.shape_cast %23 : vector<512xf32> to vector<512x1xf32>
    %cst_18 = arith.constant 0.00787401571 : f32
    %25 = vector.broadcast %cst_18 : f32 to vector<512x1xf32>
    %26 = arith.mulf %24, %25 : vector<512x1xf32>
    %cst_19 = arith.constant 0.000000e+00 : f32
    %27 = vector.broadcast %cst_19 : f32 to vector<512x1xf32>
    %28 = arith.maximumf %26, %27 : vector<512x1xf32>
    %29 = math.rsqrt %28 : vector<512x1xf32>
    %30 = vector.broadcast %29 : vector<512x1xf32> to vector<512x128xf32>
    %31 = vector.broadcast %13 : vector<1x128xf32> to vector<512x128xf32>
    %32 = arith.mulf %30, %31 : vector<512x128xf32>
    %33 = arith.mulf %21, %32 : vector<512x128xf32>
    %34 = vector.broadcast %14 : vector<1x128xf32> to vector<512x128xf32>
    %35 = arith.addf %33, %34 : vector<512x128xf32>
    %c0_20 = arith.constant 0 : index
    %c0_21 = arith.constant 0 : index
    %36 = vector.load %arg8[%c0_20, %c0_21] : memref<512x128xf32, #tpu.memory_space<vmem>>, vector<512x128xf32>
    tpu.vector_store %arg8[%c0_20, %c0_21], %35 {strides = array<i32>} : memref<512x128xf32, #tpu.memory_space<vmem>>, vector<512x128xf32>,
    return
  }
  func.func @transform_0(%arg0: i32) -> (i32, i32) {
    %c0_i32 = arith.constant 0 : i32
    %c0_i32_0 = arith.constant 0 : i32
    return %arg0, %c0_i32 : i32, i32
  }
  func.func @transform_1(%arg0: i32) -> (i32, i32) {
    %c0_i32 = arith.constant 0 : i32
    %c0_i32_0 = arith.constant 0 : i32
    %c0_i32_1 = arith.constant 0 : i32
    return %c0_i32, %c0_i32_0 : i32, i32
  }
  func.func @transform_2(%arg0: i32) -> (i32, i32) {
    %c0_i32 = arith.constant 0 : i32
    %c0_i32_0 = arith.constant 0 : i32
    %c0_i32_1 = arith.constant 0 : i32
    return %c0_i32, %c0_i32_0 : i32, i32
  }
  func.func @transform_3(%arg0: i32) -> (i32, i32) {
    %c0_i32 = arith.constant 0 : i32
    %c0_i32_0 = arith.constant 0 : i32
    %c0_i32_1 = arith.constant 0 : i32
    return %c0_i32, %c0_i32_0 : i32, i32
  }
  func.func @transform_4(%arg0: i32) -> (i32, i32) {
    %c0_i32 = arith.constant 0 : i32
    %c0_i32_0 = arith.constant 0 : i32
    %c0_i32_1 = arith.constant 0 : i32
    return %c0_i32, %c0_i32_0 : i32, i32
  }
  func.func @transform_5(%arg0: i32) -> (i32, i32) {
    %c0_i32 = arith.constant 0 : i32
    %c0_i32_0 = arith.constant 0 : i32
    %c0_i32_1 = arith.constant 0 : i32
    return %c0_i32, %c0_i32_0 : i32, i32
  }
  func.func @transform_6(%arg0: i32) -> (i32, i32) {
    %c0_i32 = arith.constant 0 : i32
    %c0_i32_0 = arith.constant 0 : i32
    %c0_i32_1 = arith.constant 0 : i32
    return %c0_i32, %c0_i32_0 : i32, i32
  }
  func.func @transform_7(%arg0: i32) -> (i32, i32) {
    %c0_i32 = arith.constant 0 : i32
    %c0_i32_0 = arith.constant 0 : i32
    return %arg0, %c0_i32 : i32, i32
  }
}

</mosaic_0001>

<llo_original>
// kernel: tpu_custom_call.1
$region0: #{tpu_custom_call.1}
  #allocation0 [shape = 'u32[]', space=smem, size = 0x4, offset = 0x4, fixed_abs, tag = 'smem constant byte address 0x4 - core index']
  #allocation1 [shape = 'u32[144,128]{1,0:T(1,128)}', space=vmem, size = 0x12000, scoped, tag = 'internal scratch']
  %s0 = inlined_call_operand.hbm [shape: f32[1024,128], index: 0, kind: input, shape index: {}]
  %s1 = inlined_call_operand.hbm [shape: f32[128,256], index: 1, kind: input, shape index: {}]
  %s2 = inlined_call_operand.vmem [shape: f32[1,256], index: 2, kind: input, shape index: {}]
  %s3 = inlined_call_operand.hbm [shape: f32[256,128], index: 3, kind: input, shape index: {}]
  %s4 = inlined_call_operand.vmem [shape: f32[1,128], index: 4, kind: input, shape index: {}]
  %s5 = inlined_call_operand.vmem [shape: f32[1,128], index: 5, kind: input, shape index: {}]
  %s6 = inlined_call_operand.vmem [shape: f32[1,128], index: 6, kind: input, shape index: {}]
  %s7 = inlined_call_operand.hbm [shape: f32[1024,128], index: 7, kind: output, shape index: {}]
  %s8 = sld [smem:[#allocation0]]
  $region73: #{tpu_custom_call.1} parent=0
    _
  %s10 = ssub.s32 1, %s8
  %s11 = scalar_select 0, %s10, %s8
  $region1: #{tpu_custom_call.1} parent=0
    #allocation2 [shape = 'u8[524288]{0}', space=vmem, size = 0x80000, scoped, tag = 'input window, operand 0']
    #allocation3 [shape = 's32[2]{0}', space=sflag, size = 0x8, scoped, tag = 'scoped memory for tpu_custom_call.1']
    #allocation4 [shape = 's32[2]{0}', space=sflag, size = 0x8, scoped, tag = 'scoped memory for tpu_custom_call.1']
    #allocation5 [shape = 'u8[131072]{0}', space=vmem, size = 0x20000, scoped, tag = 'input window, operand 1, single buffered']
    #allocation6 [shape = 's32[1]{0}', space=sflag, size = 0x4, scoped, tag = 'scoped memory for tpu_custom_call.1']
    #allocation7 [shape = 'u8[131072]{0}', space=vmem, size = 0x20000, scoped, tag = 'input window, operand 3, single buffered']
    #allocation8 [shape = 'u8[524288]{0}', space=vmem, size = 0x80000, scoped, tag = 'output window, operand 0']
    %12 = vsyncpa [#allocation3], 0
    %s13 = scalar_lea.sflag [#allocation3], 1
    %14 = vsyncpa %s13, 0
    %15 = vsyncpa [#allocation6], 0
    %16 = vsyncpa [#allocation4], 0
    %s17 = scalar_lea.sflag [#allocation4], 1
    %18 = vsyncpa %s17, 0
    loop: start=0, step=1, limit=4
    $region2: #{tpu_custom_call.1} parent=1 // loop_pre_header
      _
    $region3: #{tpu_custom_call.1} parent=1 // loop_header
      %s20 = sphi 0, %s24
      %p21 = scmp.ge.s32.totalorder %s20, 4
      %s30 = sphi 0, %s32
      %s33 = sphi 0, %s30
      %s34 = sphi 0, %s33
      %s50 = sphi 0, %s34
      %s54 = sphi 0, %s54
      %s56 = sphi 0, %s54
      %s57 = sphi 0, %s56
      %s71 = sphi 0, %s57
      %s75 = sphi 0, %s75
      %s77 = sphi 0, %s75
      %s78 = sphi 0, %s77
      %s92 = sphi 0, %s78
      %s96 = sphi 0, %s96
      %s98 = sphi 0, %s96
      %s99 = sphi 0, %s98
      %s113 = sphi 0, %s99
      %s117 = sphi 0, %s117
      %s119 = sphi 0, %s117
      %s120 = sphi 0, %s119
      %s134 = sphi 0, %s120
      %s138 = sphi 0, %s138
      %s140 = sphi 0, %s138
      %s141 = sphi 0, %s140
      %s155 = sphi 0, %s141
      %s159 = sphi 0, %s159
      %s161 = sphi 0, %s159
      %s162 = sphi 0, %s161
      %s176 = sphi 0, %s162
      %s182 = sphi 0, %s184
      %s185 = sphi 0, %s182
      %s186 = sphi 0, %s185
      %s202 = sphi 0, %s186
    $region4: #{tpu_custom_call.1} parent=1 // loop_header_branch
      %23 = sbr.rel (%p21) target = $region8
    $region5: #{tpu_custom_call.1} parent=1 // loop_body
      %s25 = ssub.s32 %s20, 1
      %s26 = ssub.s32 %s20, 2
      %s27 = sadd.s32 %s20, 1
      %s28 = ssub.s32 %s20, %s27
      %p29 = scmp.eq.s32.totalorder %s28, 0
      %s31 = sadd.s32 %s30, 1
      %s32 = scalar_select %p29, %s30, %s31
      %p35 = pneg %p29
      %p36 = scmp.eq.s32.totalorder %s20, 1
      %p37 = por %p35, %p36
      %p38 = scmp.ne.s32.totalorder %s30, %s33
      %p39 = scmp.eq.s32.totalorder %s20, 0
      %p40 = por %p38, %p39
      %p41 = scmp.ne.s32.totalorder %s30, %s33
      %p42 = scmp.eq.s32.totalorder %s25, 1
      %p43 = por %p41, %p42
      %p44 = scmp.ne.s32.totalorder %s33, %s34
      %p45 = scmp.eq.s32.totalorder %s25, 0
      %p46 = por %p44, %p45
      %p47 = scmp.ne.s32.totalorder %s33, %s34
      %p48 = scmp.eq.s32.totalorder %s26, 1
      %p49 = por %p47, %p48
      %p51 = scmp.ne.s32.totalorder %s34, %s50
      %p52 = scmp.eq.s32.totalorder %s26, 0
      %p53 = por %p51, %p52
      %s55 = sadd.s32 %s54, 1
      %p58 = scmp.eq.s32.totalorder %s20, 1
      %p59 = scmp.ne.s32.totalorder %s54, %s56
      %p60 = scmp.eq.s32.totalorder %s20, 0
      %p61 = por %p59, %p60
      %p62 = scmp.ne.s32.totalorder %s54, %s56
      %p63 = scmp.eq.s32.totalorder %s25, 1
      %p64 = por %p62, %p63
      %p65 = scmp.ne.s32.totalorder %s56, %s57
      %p66 = scmp.eq.s32.totalorder %s25, 0
      %p67 = por %p65, %p66
      %p68 = scmp.ne.s32.totalorder %s56, %s57
      %p69 = scmp.eq.s32.totalorder %s26, 1
      %p70 = por %p68, %p69
      %p72 = scmp.ne.s32.totalorder %s57, %s71
      %p73 = scmp.eq.s32.totalorder %s26, 0
      %p74 = por %p72, %p73
      %s76 = sadd.s32 %s75, 1
      %p79 = scmp.eq.s32.totalorder %s20, 1
      %p80 = scmp.ne.s32.totalorder %s75, %s77
      %p81 = scmp.eq.s32.totalorder %s20, 0
      %p82 = por %p80, %p81
      %p83 = scmp.ne.s32.totalorder %s75, %s77
      %p84 = scmp.eq.s32.totalorder %s25, 1
      %p85 = por %p83, %p84
      %p86 = scmp.ne.s32.totalorder %s77, %s78
      %p87 = scmp.eq.s32.totalorder %s25, 0
      %p88 = por %p86, %p87
      %p89 = scmp.ne.s32.totalorder %s77, %s78
      %p90 = scmp.eq.s32.totalorder %s26, 1
      %p91 = por %p89, %p90
      %p93 = scmp.ne.s32.totalorder %s78, %s92
      %p94 = scmp.eq.s32.totalorder %s26, 0
      %p95 = por %p93, %p94
      %s97 = sadd.s32 %s96, 1
      %p100 = scmp.eq.s32.totalorder %s20, 1
      %p101 = scmp.ne.s32.totalorder %s96, %s98
      %p102 = scmp.eq.s32.totalorder %s20, 0
      %p103 = por %p101, %p102
      %p104 = scmp.ne.s32.totalorder %s96, %s98
      %p105 = scmp.eq.s32.totalorder %s25, 1
      %p106 = por %p104, %p105
      %p107 = scmp.ne.s32.totalorder %s98, %s99
      %p108 = scmp.eq.s32.totalorder %s25, 0
      %p109 = por %p107, %p108
      %p110 = scmp.ne.s32.totalorder %s98, %s99
      %p111 = scmp.eq.s32.totalorder %s26, 1
      %p112 = por %p110, %p111
      %p114 = scmp.ne.s32.totalorder %s99, %s113
      %p115 = scmp.eq.s32.totalorder %s26, 0
      %p116 = por %p114, %p115
      %s118 = sadd.s32 %s117, 1
      %p121 = scmp.eq.s32.totalorder %s20, 1
      %p122 = scmp.ne.s32.totalorder %s117, %s119
      %p123 = scmp.eq.s32.totalorder %s20, 0
      %p124 = por %p122, %p123
      %p125 = scmp.ne.s32.totalorder %s117, %s119
      %p126 = scmp.eq.s32.totalorder %s25, 1
      %p127 = por %p125, %p126
      %p128 = scmp.ne.s32.totalorder %s119, %s120
      %p129 = scmp.eq.s32.totalorder %s25, 0
      %p130 = por %p128, %p129
      %p131 = scmp.ne.s32.totalorder %s119, %s120
      %p132 = scmp.eq.s32.totalorder %s26, 1
      %p133 = por %p131, %p132
      %p135 = scmp.ne.s32.totalorder %s120, %s134
      %p136 = scmp.eq.s32.totalorder %s26, 0
      %p137 = por %p135, %p136
      %s139 = sadd.s32 %s138, 1
      %p142 = scmp.eq.s32.totalorder %s20, 1
      %p143 = scmp.ne.s32.totalorder %s138, %s140
      %p144 = scmp.eq.s32.totalorder %s20, 0
      %p145 = por %p143, %p144
      %p146 = scmp.ne.s32.totalorder %s138, %s140
      %p147 = scmp.eq.s32.totalorder %s25, 1
      %p148 = por %p146, %p147
      %p149 = scmp.ne.s32.totalorder %s140, %s141
      %p150 = scmp.eq.s32.totalorder %s25, 0
      %p151 = por %p149, %p150
      %p152 = scmp.ne.s32.totalorder %s140, %s141
      %p153 = scmp.eq.s32.totalorder %s26, 1
      %p154 = por %p152, %p153
      %p156 = scmp.ne.s32.totalorder %s141, %s155
      %p157 = scmp.eq.s32.totalorder %s26, 0
      %p158 = por %p156, %p157
      %s160 = sadd.s32 %s159, 1
      %p163 = scmp.eq.s32.totalorder %s20, 1
      %p164 = scmp.ne.s32.totalorder %s159, %s161
      %p165 = scmp.eq.s32.totalorder %s20, 0
      %p166 = por %p164, %p165
      %p167 = scmp.ne.s32.totalorder %s159, %s161
      %p168 = scmp.eq.s32.totalorder %s25, 1
      %p169 = por %p167, %p168
      %p170 = scmp.ne.s32.totalorder %s161, %s162
      %p171 = scmp.eq.s32.totalorder %s25, 0
      %p172 = por %p170, %p171
      %p173 = scmp.ne.s32.totalorder %s161, %s162
      %p174 = scmp.eq.s32.totalorder %s26, 1
      %p175 = por %p173, %p174
      %p177 = scmp.ne.s32.totalorder %s162, %s176
      %p178 = scmp.eq.s32.totalorder %s26, 0
      %p179 = por %p177, %p178
      %s180 = ssub.s32 %s20, %s27
      %p181 = scmp.eq.s32.totalorder %s180, 0
      %s183 = sadd.s32 %s182, 1
      %s184 = scalar_select %p181, %s182, %s183
      %p187 = pneg %p181
      %p188 = scmp.eq.s32.totalorder %s20, 1
      %p189 = por %p187, %p188
      %p190 = scmp.ne.s32.totalorder %s182, %s185
      %p191 = scmp.eq.s32.totalorder %s20, 0
      %p192 = por %p190, %p191
      %p193 = scmp.ne.s32.totalorder %s182, %s185
      %p194 = scmp.eq.s32.totalorder %s25, 1
      %p195 = por %p193, %p194
      %p196 = scmp.ne.s32.totalorder %s185, %s186
      %p197 = scmp.eq.s32.totalorder %s25, 0
      %p198 = por %p196, %p197
      %p199 = scmp.ne.s32.totalorder %s185, %s186
      %p200 = scmp.eq.s32.totalorder %s26, 1
      %p201 = por %p199, %p200
      %p203 = scmp.ne.s32.totalorder %s186, %s202
      %p204 = scmp.eq.s32.totalorder %s26, 0
      %p205 = por %p203, %p204
      %p206 = scmp.le.s32.totalorder 1, %s20
      %p207 = scmp.lt.s32.totalorder %s20, 3
      %p208 = pnand %p206, %p207
      %p209 = pneg %p208
      // Predicated region
      $region9: #{tpu_custom_call.1} parent=5 // pred_check
        _
      $region10: #{tpu_custom_call.1} parent=5 // pred_check_branch
        %211 = sbr.rel (%p208) target = $region12
      $region11: #{tpu_custom_call.1} parent=5 // pred_region
        %s212 = ssub.s32 %s20, 1
        // Predicated region
        $region13: #{tpu_custom_call.1} parent=11 // pred_check
          %p213 = pneg %p67
        $region14: #{tpu_custom_call.1} parent=11 // pred_check_branch
          %215 = sbr.rel (%p213) target = $region16
        $region15: #{tpu_custom_call.1} parent=11 // pred_region
          %s217 = ssub.s32 4096, 4096
          %218 = vsyncadd [#allocation6], %s217
          %s219 = sshll.u32 [#allocation5], 4
          %s220 = int_to_ptr.vmem [resolvable:$true] %s219
          %225 = dma.hbm_to_vmem [thread:$0]  %s1, 4096, %s220, [#allocation6], 256, 256, 16
        $region16: #{tpu_custom_call.1} parent=11 // pred_fallthru
          _
        // Predicated region
        $region17: #{tpu_custom_call.1} parent=11 // pred_check
          %p226 = pneg %p88
        $region18: #{tpu_custom_call.1} parent=11 // pred_check_branch
          %228 = sbr.rel (%p226) target = $region20
        $region19: #{tpu_custom_call.1} parent=11 // pred_region
          _
        $region20: #{tpu_custom_call.1} parent=11 // pred_fallthru
          _
        // Predicated region
        $region21: #{tpu_custom_call.1} parent=11 // pred_check
          %p229 = pneg %p109
        $region22: #{tpu_custom_call.1} parent=11 // pred_check_branch
          %231 = sbr.rel (%p229) target = $region24
        $region23: #{tpu_custom_call.1} parent=11 // pred_region
          %s233 = ssub.s32 4096, 4096
          %234 = vsyncadd [#allocation6], %s233
          %s235 = sshll.u32 [#allocation7], 4
          %s236 = int_to_ptr.vmem [resolvable:$true] %s235
          %241 = dma.hbm_to_vmem [thread:$0]  %s3, 4096, %s236, [#allocation6], 128, 128, 8
        $region24: #{tpu_custom_call.1} parent=11 // pred_fallthru
          _
        // Predicated region
        $region25: #{tpu_custom_call.1} parent=11 // pred_check
          %p242 = pneg %p130
        $region26: #{tpu_custom_call.1} parent=11 // pred_check_branch
          %244 = sbr.rel (%p242) target = $region28
        $region27: #{tpu_custom_call.1} parent=11 // pred_region
          _
        $region28: #{tpu_custom_call.1} parent=11 // pred_fallthru
          _
        // Predicated region
        $region29: #{tpu_custom_call.1} parent=11 // pred_check
          %p245 = pneg %p151
        $region30: #{tpu_custom_call.1} parent=11 // pred_check_branch
          %247 = sbr.rel (%p245) target = $region32
        $region31: #{tpu_custom_call.1} parent=11 // pred_region
          _
        $region32: #{tpu_custom_call.1} parent=11 // pred_fallthru
          _
        // Predicated region
        $region33: #{tpu_custom_call.1} parent=11 // pred_check
          %p248 = pneg %p172
        $region34: #{tpu_custom_call.1} parent=11 // pred_check_branch
          %250 = sbr.rel (%p248) target = $region36
        $region35: #{tpu_custom_call.1} parent=11 // pred_region
          _
        $region36: #{tpu_custom_call.1} parent=11 // pred_fallthru
          _
      $region12: #{tpu_custom_call.1} parent=5 // pred_fallthru
        _
      %p251 = scmp.lt.s32.totalorder %s20, 2
      // Predicated region
      $region37: #{tpu_custom_call.1} parent=5 // pred_check
        %p252 = pneg %p251
      $region38: #{tpu_custom_call.1} parent=5 // pred_check_branch
        %254 = sbr.rel (%p252) target = $region40
      $region39: #{tpu_custom_call.1} parent=5 // pred_region
        // Predicated region
        $region41: #{tpu_custom_call.1} parent=39 // pred_check
          %p255 = pneg %p40
        $region42: #{tpu_custom_call.1} parent=39 // pred_check_branch
          %257 = sbr.rel (%p255) target = $region44
        $region43: #{tpu_custom_call.1} parent=39 // pred_region
          %s258 = sand.u32 %s30, 1
          %s259 = scalar_lea.sflag [#allocation3], %s258
          %s260 = sand.u32 %s30, 1
          %s261 = smul.addr %s260, 512
          %s262 = scalar_lea.vmem [#allocation2], %s261
          %s263 = smul.u32 64, %s20
          %s265 = ssub.s32 8192, 8192
          %266 = vsyncadd %s259, %s265
          %s267 = smul.addr %s263, 128
          %s268 = scalar_lea.hbm %s0, %s267
          %s269 = sshll.u32 %s262, 4
          %s270 = int_to_ptr.vmem [resolvable:$true] %s269
          %275 = dma.hbm_to_vmem [thread:$0]  %s268, 8192, %s270, %s259, 128, 128, 8
        $region44: #{tpu_custom_call.1} parent=39 // pred_fallthru
          _
      $region40: #{tpu_custom_call.1} parent=5 // pred_fallthru
        _
      %p276 = scmp.le.s32.totalorder 1, %s20
      %p277 = scmp.lt.s32.totalorder %s20, 3
      %p278 = pnand %p276, %p277
      %p279 = pneg %p278
      // Predicated region
      $region45: #{tpu_custom_call.1} parent=5 // pred_check
        _
      $region46: #{tpu_custom_call.1} parent=5 // pred_check_branch
        %281 = sbr.rel (%p278) target = $region48
      $region47: #{tpu_custom_call.1} parent=5 // pred_region
        %s282 = ssub.s32 %s20, 1
        %s283 = sand.u32 %s33, 1
        %s284 = scalar_lea.sflag [#allocation3], %s283
        %s285 = sand.u32 %s33, 1
        %s286 = smul.addr %s285, 512
        %s287 = scalar_lea.vmem [#allocation2], %s286
        // Predicated region
        $region49: #{tpu_custom_call.1} parent=47 // pred_check
          %p288 = pneg %p46
        $region50: #{tpu_custom_call.1} parent=47 // pred_check_branch
          %290 = sbr.rel (%p288) target = $region52
        $region51: #{tpu_custom_call.1} parent=47 // pred_region
          %291 = dma.done %s284, 8192
        $region52: #{tpu_custom_call.1} parent=47 // pred_fallthru
          _
        // Predicated region
        $region53: #{tpu_custom_call.1} parent=47 // pred_check
          %p292 = pneg %p67
        $region54: #{tpu_custom_call.1} parent=47 // pred_check_branch
          %294 = sbr.rel (%p292) target = $region56
        $region55: #{tpu_custom_call.1} parent=47 // pred_region
          %295 = dma.done [#allocation6], 4096
        $region56: #{tpu_custom_call.1} parent=47 // pred_fallthru
          _
        // Predicated region
        $region57: #{tpu_custom_call.1} parent=47 // pred_check
          %p296 = pneg %p109
        $region58: #{tpu_custom_call.1} parent=47 // pred_check_branch
          %298 = sbr.rel (%p296) target = $region60
        $region59: #{tpu_custom_call.1} parent=47 // pred_region
          %299 = dma.done [#allocation6], 4096
        $region60: #{tpu_custom_call.1} parent=47 // pred_fallthru
          _
        %s300 = sand.u32 %s33, 1
        %s301 = scalar_lea.sflag [#allocation3], %s300
        %s302 = sand.u32 %s33, 1
        %s303 = smul.addr %s302, 512
        %s304 = scalar_lea.vmem [#allocation2], %s303
        %p305 = pneg %p46
        %p306 = pneg %p43
        %p307 = pneg %p67
        %p308 = pneg %p64
        %p309 = pneg %p88
        %p310 = pneg %p85
        %p311 = pneg %p109
        %p312 = pneg %p106
        %p313 = pneg %p130
        %p314 = pneg %p127
        %p315 = pneg %p151
        %p316 = pneg %p148
        %p317 = pneg %p172
        %p318 = pneg %p169
        %p319 = pneg %p198
        %p320 = pneg %p195
        %s321 = sand.u32 %s185, 1
        %s322 = scalar_lea.sflag [#allocation4], %s321
        %s323 = sand.u32 %s185, 1
        %s324 = smul.addr %s323, 512
        %s325 = scalar_lea.vmem [#allocation8], %s324
        %s326 = smul.u32 64, %s25
        %s327 = smul.u32 64, %s25
        %v328 = vld [vmem:[%s287] sm:$0xff]
        %v329 = vld [vmem:[%s287 + $0x8] sm:$0xff]
        %v330 = vld [vmem:[%s287 + $0x10] sm:$0xff]
        %v331 = vld [vmem:[%s287 + $0x18] sm:$0xff]
        %v332 = vld [vmem:[%s287 + $0x20] sm:$0xff]
        %v333 = vld [vmem:[%s287 + $0x28] sm:$0xff]
        %v334 = vld [vmem:[%s287 + $0x30] sm:$0xff]
        %v335 = vld [vmem:[%s287 + $0x38] sm:$0xff]
        %v336 = vld [vmem:[%s287 + $0x40] sm:$0xff]
        %v337 = vld [vmem:[%s287 + $0x48] sm:$0xff]
        %v338 = vld [vmem:[%s287 + $0x50] sm:$0xff]
        %v339 = vld [vmem:[%s287 + $0x58] sm:$0xff]
        %v340 = vld [vmem:[%s287 + $0x60] sm:$0xff]
        %v341 = vld [vmem:[%s287 + $0x68] sm:$0xff]
        %v342 = vld [vmem:[%s287 + $0x70] sm:$0xff]
        %v343 = vld [vmem:[%s287 + $0x78] sm:$0xff]
        %v344 = vld [vmem:[%s287 + $0x80] sm:$0xff]
        %v345 = vld [vmem:[%s287 + $0x88] sm:$0xff]
        %v346 = vld [vmem:[%s287 + $0x90] sm:$0xff]
        %v347 = vld [vmem:[%s287 + $0x98] sm:$0xff]
        %v348 = vld [vmem:[%s287 + $0xa0] sm:$0xff]
        %v349 = vld [vmem:[%s287 + $0xa8] sm:$0xff]
        %v350 = vld [vmem:[%s287 + $0xb0] sm:$0xff]
        %v351 = vld [vmem:[%s287 + $0xb8] sm:$0xff]
        %v352 = vld [vmem:[%s287 + $0xc0] sm:$0xff]
        %v353 = vld [vmem:[%s287 + $0xc8] sm:$0xff]
        %v354 = vld [vmem:[%s287 + $0xd0] sm:$0xff]
        %v355 = vld [vmem:[%s287 + $0xd8] sm:$0xff]
        %v356 = vld [vmem:[%s287 + $0xe0] sm:$0xff]
        %v357 = vld [vmem:[%s287 + $0xe8] sm:$0xff]
        %v358 = vld [vmem:[%s287 + $0xf0] sm:$0xff]
        %v359 = vld [vmem:[%s287 + $0xf8] sm:$0xff]
        %v360 = vld [vmem:[%s287 + $0x100] sm:$0xff]
        %v361 = vld [vmem:[%s287 + $0x108] sm:$0xff]
        %v362 = vld [vmem:[%s287 + $0x110] sm:$0xff]
        %v363 = vld [vmem:[%s287 + $0x118] sm:$0xff]
        %v364 = vld [vmem:[%s287 + $0x120] sm:$0xff]
        %v365 = vld [vmem:[%s287 + $0x128] sm:$0xff]
        %v366 = vld [vmem:[%s287 + $0x130] sm:$0xff]
        %v367 = vld [vmem:[%s287 + $0x138] sm:$0xff]
        %v368 = vld [vmem:[%s287 + $0x140] sm:$0xff]
        %v369 = vld [vmem:[%s287 + $0x148] sm:$0xff]
        %v370 = vld [vmem:[%s287 + $0x150] sm:$0xff]
        %v371 = vld [vmem:[%s287 + $0x158] sm:$0xff]
        %v372 = vld [vmem:[%s287 + $0x160] sm:$0xff]
        %v373 = vld [vmem:[%s287 + $0x168] sm:$0xff]
        %v374 = vld [vmem:[%s287 + $0x170] sm:$0xff]
        %v375 = vld [vmem:[%s287 + $0x178] sm:$0xff]
        %v376 = vld [vmem:[%s287 + $0x180] sm:$0xff]
        %v377 = vld [vmem:[%s287 + $0x188] sm:$0xff]
        %v378 = vld [vmem:[%s287 + $0x190] sm:$0xff]
        %v379 = vld [vmem:[%s287 + $0x198] sm:$0xff]
        %v380 = vld [vmem:[%s287 + $0x1a0] sm:$0xff]
        %v381 = vld [vmem:[%s287 + $0x1a8] sm:$0xff]
        %v382 = vld [vmem:[%s287 + $0x1b0] sm:$0xff]
        %v383 = vld [vmem:[%s287 + $0x1b8] sm:$0xff]
        %v384 = vld [vmem:[%s287 + $0x1c0] sm:$0xff]
        %v385 = vld [vmem:[%s287 + $0x1c8] sm:$0xff]
        %v386 = vld [vmem:[%s287 + $0x1d0] sm:$0xff]
        %v387 = vld [vmem:[%s287 + $0x1d8] sm:$0xff]
        %v388 = vld [vmem:[%s287 + $0x1e0] sm:$0xff]
        %v389 = vld [vmem:[%s287 + $0x1e8] sm:$0xff]
        %v390 = vld [vmem:[%s287 + $0x1f0] sm:$0xff]
        %v391 = vld [vmem:[%s287 + $0x1f8] sm:$0xff]
        %v392 = vld [vmem:[#allocation5] sm:$0xff]
        %v393 = vld [vmem:[#allocation5 + $0x8] sm:$0xff]
        %v394 = vld [vmem:[#allocation5 + $0x10] sm:$0xff]
        %v395 = vld [vmem:[#allocation5 + $0x18] sm:$0xff]
        %v396 = vld [vmem:[#allocation5 + $0x20] sm:$0xff]
        %v397 = vld [vmem:[#allocation5 + $0x28] sm:$0xff]
        %v398 = vld [vmem:[#allocation5 + $0x30] sm:$0xff]
        %v399 = vld [vmem:[#allocation5 + $0x38] sm:$0xff]
        %v400 = vld [vmem:[#allocation5 + $0x40] sm:$0xff]
        %v401 = vld [vmem:[#allocation5 + $0x48] sm:$0xff]
        %v402 = vld [vmem:[#allocation5 + $0x50] sm:$0xff]
        %v403 = vld [vmem:[#allocation5 + $0x58] sm:$0xff]
        %v404 = vld [vmem:[#allocation5 + $0x60] sm:$0xff]
        %v405 = vld [vmem:[#allocation5 + $0x68] sm:$0xff]
        %v406 = vld [vmem:[#allocation5 + $0x70] sm:$0xff]
        %v407 = vld [vmem:[#allocation5 + $0x78] sm:$0xff]
        %v408 = vld [vmem:[#allocation5 + $0x80] sm:$0xff]
        %v409 = vld [vmem:[#allocation5 + $0x88] sm:$0xff]
        %v410 = vld [vmem:[#allocation5 + $0x90] sm:$0xff]
        %v411 = vld [vmem:[#allocation5 + $0x98] sm:$0xff]
        %v412 = vld [vmem:[#allocation5 + $0xa0] sm:$0xff]
        %v413 = vld [vmem:[#allocation5 + $0xa8] sm:$0xff]
        %v414 = vld [vmem:[#allocation5 + $0xb0] sm:$0xff]
        %v415 = vld [vmem:[#allocation5 + $0xb8] sm:$0xff]
        %v416 = vld [vmem:[#allocation5 + $0xc0] sm:$0xff]
        %v417 = vld [vmem:[#allocation5 + $0xc8] sm:$0xff]
        %v418 = vld [vmem:[#allocation5 + $0xd0] sm:$0xff]
        %v419 = vld [vmem:[#allocation5 + $0xd8] sm:$0xff]
        %v420 = vld [vmem:[#allocation5 + $0xe0] sm:$0xff]
        %v421 = vld [vmem:[#allocation5 + $0xe8] sm:$0xff]
        %v422 = vld [vmem:[#allocation5 + $0xf0] sm:$0xff]
        %v423 = vld [vmem:[#allocation5 + $0xf8] sm:$0xff]
        %v424 = vld [vmem:[%s2] sm:$0x3]
        %v426 = vlaneseq
        %v427 = vshrl.u32 %v426, 7
        %v428 = vsub.s32 0, %v427
        %v429 = vrot.slane %v424, %v428
        %v430 = vlaneseq
        %v431 = vshrl.u32 %v430, 7
        %v432 = vsub.s32 1, %v431
        %v433 = vrot.slane %v424, %v432
        %436 = vmatprep.subr.mxu0 %v393
        %437 = vmatpush1.msra.mxu0 %v392
        %438 = vmatprep.subr.mxu0 %v395
        %439 = vmatpush1.msra.mxu0 %v394
        %440 = vmatprep.subr.mxu0 %v397
        %441 = vmatpush1.msra.mxu0 %v396
        %442 = vmatprep.subr.mxu0 %v399
        %443 = vmatpush1.msra.mxu0 %v398
        %444 = vmatprep.subr.mxu0 %v401
        %445 = vmatpush1.msra.mxu0 %v400
        %446 = vmatprep.subr.mxu0 %v403
        %447 = vmatpush1.msra.mxu0 %v402
        %448 = vmatprep.subr.mxu0 %v405
        %449 = vmatpush1.msra.mxu0 %v404
        %450 = vmatprep.subr.mxu0 %v407
        %451 = vmatpush1.msra.mxu0 %v406
        %452 = vmatprep.subr.mxu0 %v409
        %453 = vmatpush1.msra.mxu0 %v408
        %454 = vmatprep.subr.mxu0 %v411
        %455 = vmatpush1.msra.mxu0 %v410
        %456 = vmatprep.subr.mxu0 %v413
        %457 = vmatpush1.msra.mxu0 %v412
        %458 = vmatprep.subr.mxu0 %v415
        %459 = vmatpush1.msra.mxu0 %v414
        %460 = vmatprep.subr.mxu0 %v417
        %461 = vmatpush1.msra.mxu0 %v416
        %462 = vmatprep.subr.mxu0 %v419
        %463 = vmatpush1.msra.mxu0 %v418
        %464 = vmatprep.subr.mxu0 %v421
        %465 = vmatpush1.msra.mxu0 %v420
        %466 = vmatprep.subr.mxu0 %v423
        %467 = vmatpush1.msra.mxu0 %v422
        %468 = vmatprep.subr.mxu0 0.0
        %469 = vmatpush1.msra.mxu0 0.0
        %470 = vmatprep.subr.mxu0 0.0
        %471 = vmatpush1.msra.mxu0 0.0
        %472 = vmatprep.subr.mxu0 0.0
        %473 = vmatpush1.msra.mxu0 0.0
        %474 = vmatprep.subr.mxu0 0.0
        %475 = vmatpush1.msra.mxu0 0.0
        %476 = vmatprep.subr.mxu0 0.0
        %477 = vmatpush1.msra.mxu0 0.0
        %478 = vmatprep.subr.mxu0 0.0
        %479 = vmatpush1.msra.mxu0 0.0
        %480 = vmatprep.subr.mxu0 0.0
        %481 = vmatpush1.msra.mxu0 0.0
        %482 = vmatprep.subr.mxu0 0.0
        %483 = vmatpush1.msra.mxu0 0.0
        %484 = vmatprep.subr.mxu0 0.0
        %485 = vmatpush1.msra.mxu0 0.0
        %486 = vmatprep.subr.mxu0 0.0
        %487 = vmatpush1.msra.mxu0 0.0
        %488 = vmatprep.subr.mxu0 0.0
        %489 = vmatpush1.msra.mxu0 0.0
        %490 = vmatprep.subr.mxu0 0.0
        %491 = vmatpush1.msra.mxu0 0.0
        %492 = vmatprep.subr.mxu0 0.0
        %493 = vmatpush1.msra.mxu0 0.0
        %494 = vmatprep.subr.mxu0 0.0
        %495 = vmatpush1.msra.mxu0 0.0
        %496 = vmatprep.subr.mxu0 0.0
        %497 = vmatpush1.msra.mxu0 0.0
        %498 = vmatprep.subr.mxu0 0.0
        %499 = vmatpush1.msra.mxu0 0.0
        %500 = vmatprep.mubr.f32.mxu0 0.0
        %501 = vmatmul.mubr.f32.gmra.mrb[0].mxu0 %v328
        %v502 = vpop.f32.mrb[0].mxu0
        %v503 = vadd.f32 %v429, %v502
        %v504 = vpop.f32.mrb[0].mxu0
        %v505 = vadd.f32 %v433, %v504
        %506 = vmatprep.mubr.f32.mxu0 0.0
        %507 = vmatmul.mubr.f32.gmra.mrb[0].mxu0 %v329
        %v508 = vpop.f32.mrb[0].mxu0
        %v509 = vadd.f32 %v429, %v508
        %v510 = vpop.f32.mrb[0].mxu0
        %v511 = vadd.f32 %v433, %v510
        %512 = vmatprep.mubr.f32.mxu0 0.0
        %513 = vmatmul.mubr.f32.gmra.mrb[0].mxu0 %v330
        %v514 = vpop.f32.mrb[0].mxu0
        %v515 = vadd.f32 %v429, %v514
        %v516 = vpop.f32.mrb[0].mxu0
        %v517 = vadd.f32 %v433, %v516
        %518 = vmatprep.mubr.f32.mxu0 0.0
        %519 = vmatmul.mubr.f32.gmra.mrb[0].mxu0 %v331
        %v520 = vpop.f32.mrb[0].mxu0
        %v521 = vadd.f32 %v429, %v520
        %v522 = vpop.f32.mrb[0].mxu0
        %v523 = vadd.f32 %v433, %v522
        %524 = vmatprep.mubr.f32.mxu0 0.0
        %525 = vmatmul.mubr.f32.gmra.mrb[0].mxu0 %v332
        %v526 = vpop.f32.mrb[0].mxu0
        %v527 = vadd.f32 %v429, %v526
        %v528 = vpop.f32.mrb[0].mxu0
        %v529 = vadd.f32 %v433, %v528
        %530 = vmatprep.mubr.f32.mxu0 0.0
        %531 = vmatmul.mubr.f32.gmra.mrb[0].mxu0 %v333
        %v532 = vpop.f32.mrb[0].mxu0
        %v533 = vadd.f32 %v429, %v532
        %v534 = vpop.f32.mrb[0].mxu0
        %v535 = vadd.f32 %v433, %v534
        %536 = vmatprep.mubr.f32.mxu0 0.0
        %537 = vmatmul.mubr.f32.gmra.mrb[0].mxu0 %v334
        %v538 = vpop.f32.mrb[0].mxu0
        %v539 = vadd.f32 %v429, %v538
        %v540 = vpop.f32.mrb[0].mxu0
        %v541 = vadd.f32 %v433, %v540
        %542 = vmatprep.mubr.f32.mxu0 0.0
        %543 = vmatmul.mubr.f32.gmra.mrb[0].mxu0 %v335
        %v544 = vpop.f32.mrb[0].mxu0
        %v545 = vadd.f32 %v429, %v544
        %v546 = vpop.f32.mrb[0].mxu0
        %v547 = vadd.f32 %v433, %v546
        %548 = vmatprep.mubr.f32.mxu0 0.0
        %549 = vmatmul.mubr.f32.gmra.mrb[0].mxu0 %v336
        %v550 = vpop.f32.mrb[0].mxu0
        %v551 = vadd.f32 %v429, %v550
        %v552 = vpop.f32.mrb[0].mxu0
        %v553 = vadd.f32 %v433, %v552
        %554 = vmatprep.mubr.f32.mxu0 0.0
        %555 = vmatmul.mubr.f32.gmra.mrb[0].mxu0 %v337
        %v556 = vpop.f32.mrb[0].mxu0
        %v557 = vadd.f32 %v429, %v556
        %v558 = vpop.f32.mrb[0].mxu0
        %v559 = vadd.f32 %v433, %v558
        %560 = vmatprep.mubr.f32.mxu0 0.0
        %561 = vmatmul.mubr.f32.gmra.mrb[0].mxu0 %v338
        %v562 = vpop.f32.mrb[0].mxu0
        %v563 = vadd.f32 %v429, %v562
        %v564 = vpop.f32.mrb[0].mxu0
        %v565 = vadd.f32 %v433, %v564
        %566 = vmatprep.mubr.f32.mxu0 0.0
        %567 = vmatmul.mubr.f32.gmra.mrb[0].mxu0 %v339
        %v568 = vpop.f32.mrb[0].mxu0
        %v569 = vadd.f32 %v429, %v568
        %v570 = vpop.f32.mrb[0].mxu0
        %v571 = vadd.f32 %v433, %v570
        %572 = vmatprep.mubr.f32.mxu0 0.0
        %573 = vmatmul.mubr.f32.gmra.mrb[0].mxu0 %v340
        %v574 = vpop.f32.mrb[0].mxu0
        %v575 = vadd.f32 %v429, %v574
        %v576 = vpop.f32.mrb[0].mxu0
        %v577 = vadd.f32 %v433, %v576
        %578 = vmatprep.mubr.f32.mxu0 0.0
        %579 = vmatmul.mubr.f32.gmra.mrb[0].mxu0 %v341
        %v580 = vpop.f32.mrb[0].mxu0
        %v581 = vadd.f32 %v429, %v580
        %v582 = vpop.f32.mrb[0].mxu0
        %v583 = vadd.f32 %v433, %v582
        %584 = vmatprep.mubr.f32.mxu0 0.0
        %585 = vmatmul.mubr.f32.gmra.mrb[0].mxu0 %v342
        %v586 = vpop.f32.mrb[0].mxu0
        %v587 = vadd.f32 %v429, %v586
        %v588 = vpop.f32.mrb[0].mxu0
        %v589 = vadd.f32 %v433, %v588
        %590 = vmatprep.mubr.f32.mxu0 0.0
        %591 = vmatmul.mubr.f32.gmra.mrb[0].mxu0 %v343
        %v592 = vpop.f32.mrb[0].mxu0
        %v593 = vadd.f32 %v429, %v592
        %v594 = vpop.f32.mrb[0].mxu0
        %v595 = vadd.f32 %v433, %v594
        %596 = vmatprep.mubr.f32.mxu0 0.0
        %597 = vmatmul.mubr.f32.gmra.mrb[0].mxu0 %v344
        %v598 = vpop.f32.mrb[0].mxu0
        %v599 = vadd.f32 %v429, %v598
        %v600 = vpop.f32.mrb[0].mxu0
        %v601 = vadd.f32 %v433, %v600
        %602 = vmatprep.mubr.f32.mxu0 0.0
        %603 = vmatmul.mubr.f32.gmra.mrb[0].mxu0 %v345
        %v604 = vpop.f32.mrb[0].mxu0
        %v605 = vadd.f32 %v429, %v604
        %v606 = vpop.f32.mrb[0].mxu0
        %v607 = vadd.f32 %v433, %v606
        %608 = vmatprep.mubr.f32.mxu0 0.0
        %609 = vmatmul.mubr.f32.gmra.mrb[0].mxu0 %v346
        %v610 = vpop.f32.mrb[0].mxu0
        %v611 = vadd.f32 %v429, %v610
        %v612 = vpop.f32.mrb[0].mxu0
        %v613 = vadd.f32 %v433, %v612
        %614 = vmatprep.mubr.f32.mxu0 0.0
        %615 = vmatmul.mubr.f32.gmra.mrb[0].mxu0 %v347
        %v616 = vpop.f32.mrb[0].mxu0
        %v617 = vadd.f32 %v429, %v616
        %v618 = vpop.f32.mrb[0].mxu0
        %v619 = vadd.f32 %v433, %v618
        %620 = vmatprep.mubr.f32.mxu0 0.0
        %621 = vmatmul.mubr.f32.gmra.mrb[0].mxu0 %v348
        %v622 = vpop.f32.mrb[0].mxu0
        %v623 = vadd.f32 %v429, %v622
        %v624 = vpop.f32.mrb[0].mxu0
        %v625 = vadd.f32 %v433, %v624
        %626 = vmatprep.mubr.f32.mxu0 0.0
        %627 = vmatmul.mubr.f32.gmra.mrb[0].mxu0 %v349
        %v628 = vpop.f32.mrb[0].mxu0
        %v629 = vadd.f32 %v429, %v628
        %v630 = vpop.f32.mrb[0].mxu0
        %v631 = vadd.f32 %v433, %v630
        %632 = vmatprep.mubr.f32.mxu0 0.0
        %633 = vmatmul.mubr.f32.gmra.mrb[0].mxu0 %v350
        %v634 = vpop.f32.mrb[0].mxu0
        %v635 = vadd.f32 %v429, %v634
        %v636 = vpop.f32.mrb[0].mxu0
        %v637 = vadd.f32 %v433, %v636
        %638 = vmatprep.mubr.f32.mxu0 0.0
        %639 = vmatmul.mubr.f32.gmra.mrb[0].mxu0 %v351
        %v640 = vpop.f32.mrb[0].mxu0
        %v641 = vadd.f32 %v429, %v640
        %v642 = vpop.f32.mrb[0].mxu0
        %v643 = vadd.f32 %v433, %v642
        %644 = vmatprep.mubr.f32.mxu0 0.0
        %645 = vmatmul.mubr.f32.gmra.mrb[0].mxu0 %v352
        %v646 = vpop.f32.mrb[0].mxu0
        %v647 = vadd.f32 %v429, %v646
        %v648 = vpop.f32.mrb[0].mxu0
        %v649 = vadd.f32 %v433, %v648
        %650 = vmatprep.mubr.f32.mxu0 0.0
        %651 = vmatmul.mubr.f32.gmra.mrb[0].mxu0 %v353
        %v652 = vpop.f32.mrb[0].mxu0
        %v653 = vadd.f32 %v429, %v652
        %v654 = vpop.f32.mrb[0].mxu0
        %v655 = vadd.f32 %v433, %v654
        %656 = vmatprep.mubr.f32.mxu0 0.0
        %657 = vmatmul.mubr.f32.gmra.mrb[0].mxu0 %v354
        %v658 = vpop.f32.mrb[0].mxu0
        %v659 = vadd.f32 %v429, %v658
        %v660 = vpop.f32.mrb[0].mxu0
        %v661 = vadd.f32 %v433, %v660
        %662 = vmatprep.mubr.f32.mxu0 0.0
        %663 = vmatmul.mubr.f32.gmra.mrb[0].mxu0 %v355
        %v664 = vpop.f32.mrb[0].mxu0
        %v665 = vadd.f32 %v429, %v664
        %v666 = vpop.f32.mrb[0].mxu0
        %v667 = vadd.f32 %v433, %v666
        %668 = vmatprep.mubr.f32.mxu0 0.0
        %669 = vmatmul.mubr.f32.gmra.mrb[0].mxu0 %v356
        %v670 = vpop.f32.mrb[0].mxu0
        %v671 = vadd.f32 %v429, %v670
        %v672 = vpop.f32.mrb[0].mxu0
        %v673 = vadd.f32 %v433, %v672
        %674 = vmatprep.mubr.f32.mxu0 0.0
        %675 = vmatmul.mubr.f32.gmra.mrb[0].mxu0 %v357
        %v676 = vpop.f32.mrb[0].mxu0
        %v677 = vadd.f32 %v429, %v676
        %v678 = vpop.f32.mrb[0].mxu0
        %v679 = vadd.f32 %v433, %v678
        %680 = vmatprep.mubr.f32.mxu0 0.0
        %681 = vmatmul.mubr.f32.gmra.mrb[0].mxu0 %v358
        %v682 = vpop.f32.mrb[0].mxu0
        %v683 = vadd.f32 %v429, %v682
        %v684 = vpop.f32.mrb[0].mxu0
        %v685 = vadd.f32 %v433, %v684
        %686 = vmatprep.mubr.f32.mxu0 0.0
        %687 = vmatmul.mubr.f32.gmra.mrb[0].mxu0 %v359
        %v688 = vpop.f32.mrb[0].mxu0
        %v689 = vadd.f32 %v429, %v688
        %v690 = vpop.f32.mrb[0].mxu0
        %v691 = vadd.f32 %v433, %v690
        %692 = vmatprep.mubr.f32.mxu0 0.0
        %693 = vmatmul.mubr.f32.gmra.mrb[0].mxu0 %v360
        %v694 = vpop.f32.mrb[0].mxu0
        %v695 = vadd.f32 %v429, %v694
        %v696 = vpop.f32.mrb[0].mxu0
        %v697 = vadd.f32 %v433, %v696
        %698 = vmatprep.mubr.f32.mxu0 0.0
        %699 = vmatmul.mubr.f32.gmra.mrb[0].mxu0 %v361
        %v700 = vpop.f32.mrb[0].mxu0
        %v701 = vadd.f32 %v429, %v700
        %v702 = vpop.f32.mrb[0].mxu0
        %v703 = vadd.f32 %v433, %v702
        %704 = vmatprep.mubr.f32.mxu0 0.0
        %705 = vmatmul.mubr.f32.gmra.mrb[0].mxu0 %v362
        %v706 = vpop.f32.mrb[0].mxu0
        %v707 = vadd.f32 %v429, %v706
        %v708 = vpop.f32.mrb[0].mxu0
        %v709 = vadd.f32 %v433, %v708
        %710 = vmatprep.mubr.f32.mxu0 0.0
        %711 = vmatmul.mubr.f32.gmra.mrb[0].mxu0 %v363
        %v712 = vpop.f32.mrb[0].mxu0
        %v713 = vadd.f32 %v429, %v712
        %v714 = vpop.f32.mrb[0].mxu0
        %v715 = vadd.f32 %v433, %v714
        %716 = vmatprep.mubr.f32.mxu0 0.0
        %717 = vmatmul.mubr.f32.gmra.mrb[0].mxu0 %v364
        %v718 = vpop.f32.mrb[0].mxu0
        %v719 = vadd.f32 %v429, %v718
        %v720 = vpop.f32.mrb[0].mxu0
        %v721 = vadd.f32 %v433, %v720
        %722 = vmatprep.mubr.f32.mxu0 0.0
        %723 = vmatmul.mubr.f32.gmra.mrb[0].mxu0 %v365
        %v724 = vpop.f32.mrb[0].mxu0
        %v725 = vadd.f32 %v429, %v724
        %v726 = vpop.f32.mrb[0].mxu0
        %v727 = vadd.f32 %v433, %v726
        %728 = vmatprep.mubr.f32.mxu0 0.0
        %729 = vmatmul.mubr.f32.gmra.mrb[0].mxu0 %v366
        %v730 = vpop.f32.mrb[0].mxu0
        %v731 = vadd.f32 %v429, %v730
        %v732 = vpop.f32.mrb[0].mxu0
        %v733 = vadd.f32 %v433, %v732
        %734 = vmatprep.mubr.f32.mxu0 0.0
        %735 = vmatmul.mubr.f32.gmra.mrb[0].mxu0 %v367
        %v736 = vpop.f32.mrb[0].mxu0
        %v737 = vadd.f32 %v429, %v736
        %v738 = vpop.f32.mrb[0].mxu0
        %v739 = vadd.f32 %v433, %v738
        %740 = vmatprep.mubr.f32.mxu0 0.0
        %741 = vmatmul.mubr.f32.gmra.mrb[0].mxu0 %v368
        %v742 = vpop.f32.mrb[0].mxu0
        %v743 = vadd.f32 %v429, %v742
        %v744 = vpop.f32.mrb[0].mxu0
        %v745 = vadd.f32 %v433, %v744
        %746 = vmatprep.mubr.f32.mxu0 0.0
        %747 = vmatmul.mubr.f32.gmra.mrb[0].mxu0 %v369
        %v748 = vpop.f32.mrb[0].mxu0
        %v749 = vadd.f32 %v429, %v748
        %v750 = vpop.f32.mrb[0].mxu0
        %v751 = vadd.f32 %v433, %v750
        %752 = vmatprep.mubr.f32.mxu0 0.0
        %753 = vmatmul.mubr.f32.gmra.mrb[0].mxu0 %v370
        %v754 = vpop.f32.mrb[0].mxu0
        %v755 = vadd.f32 %v429, %v754
        %v756 = vpop.f32.mrb[0].mxu0
        %v757 = vadd.f32 %v433, %v756
        %758 = vmatprep.mubr.f32.mxu0 0.0
        %759 = vmatmul.mubr.f32.gmra.mrb[0].mxu0 %v371
        %v760 = vpop.f32.mrb[0].mxu0
        %v761 = vadd.f32 %v429, %v760
        %v762 = vpop.f32.mrb[0].mxu0
        %v763 = vadd.f32 %v433, %v762
        %764 = vmatprep.mubr.f32.mxu0 0.0
        %765 = vmatmul.mubr.f32.gmra.mrb[0].mxu0 %v372
        %v766 = vpop.f32.mrb[0].mxu0
        %v767 = vadd.f32 %v429, %v766
        %v768 = vpop.f32.mrb[0].mxu0
        %v769 = vadd.f32 %v433, %v768
        %770 = vmatprep.mubr.f32.mxu0 0.0
        %771 = vmatmul.mubr.f32.gmra.mrb[0].mxu0 %v373
        %v772 = vpop.f32.mrb[0].mxu0
        %v773 = vadd.f32 %v429, %v772
        %v774 = vpop.f32.mrb[0].mxu0
        %v775 = vadd.f32 %v433, %v774
        %776 = vmatprep.mubr.f32.mxu0 0.0
        %777 = vmatmul.mubr.f32.gmra.mrb[0].mxu0 %v374
        %v778 = vpop.f32.mrb[0].mxu0
        %v779 = vadd.f32 %v429, %v778
        %v780 = vpop.f32.mrb[0].mxu0
        %v781 = vadd.f32 %v433, %v780
        %782 = vmatprep.mubr.f32.mxu0 0.0
        %783 = vmatmul.mubr.f32.gmra.mrb[0].mxu0 %v375
        %v784 = vpop.f32.mrb[0].mxu0
        %v785 = vadd.f32 %v429, %v784
        %v786 = vpop.f32.mrb[0].mxu0
        %v787 = vadd.f32 %v433, %v786
        %788 = vmatprep.mubr.f32.mxu0 0.0
        %789 = vmatmul.mubr.f32.gmra.mrb[0].mxu0 %v376
        %v790 = vpop.f32.mrb[0].mxu0
        %v791 = vadd.f32 %v429, %v790
        %v792 = vpop.f32.mrb[0].mxu0
        %v793 = vadd.f32 %v433, %v792
        %794 = vmatprep.mubr.f32.mxu0 0.0
        %795 = vmatmul.mubr.f32.gmra.mrb[0].mxu0 %v377
        %v796 = vpop.f32.mrb[0].mxu0
        %v797 = vadd.f32 %v429, %v796
        %v798 = vpop.f32.mrb[0].mxu0
        %v799 = vadd.f32 %v433, %v798
        %800 = vmatprep.mubr.f32.mxu0 0.0
        %801 = vmatmul.mubr.f32.gmra.mrb[0].mxu0 %v378
        %v802 = vpop.f32.mrb[0].mxu0
        %v803 = vadd.f32 %v429, %v802
        %v804 = vpop.f32.mrb[0].mxu0
        %v805 = vadd.f32 %v433, %v804
        %806 = vmatprep.mubr.f32.mxu0 0.0
        %807 = vmatmul.mubr.f32.gmra.mrb[0].mxu0 %v379
        %v808 = vpop.f32.mrb[0].mxu0
        %v809 = vadd.f32 %v429, %v808
        %v810 = vpop.f32.mrb[0].mxu0
        %v811 = vadd.f32 %v433, %v810
        %812 = vmatprep.mubr.f32.mxu0 0.0
        %813 = vmatmul.mubr.f32.gmra.mrb[0].mxu0 %v380
        %v814 = vpop.f32.mrb[0].mxu0
        %v815 = vadd.f32 %v429, %v814
        %v816 = vpop.f32.mrb[0].mxu0
        %v817 = vadd.f32 %v433, %v816
        %818 = vmatprep.mubr.f32.mxu0 0.0
        %819 = vmatmul.mubr.f32.gmra.mrb[0].mxu0 %v381
        %v820 = vpop.f32.mrb[0].mxu0
        %v821 = vadd.f32 %v429, %v820
        %v822 = vpop.f32.mrb[0].mxu0
        %v823 = vadd.f32 %v433, %v822
        %824 = vmatprep.mubr.f32.mxu0 0.0
        %825 = vmatmul.mubr.f32.gmra.mrb[0].mxu0 %v382
        %v826 = vpop.f32.mrb[0].mxu0
        %v827 = vadd.f32 %v429, %v826
        %v828 = vpop.f32.mrb[0].mxu0
        %v829 = vadd.f32 %v433, %v828
        %830 = vmatprep.mubr.f32.mxu0 0.0
        %831 = vmatmul.mubr.f32.gmra.mrb[0].mxu0 %v383
        %v832 = vpop.f32.mrb[0].mxu0
        %v833 = vadd.f32 %v429, %v832
        %v834 = vpop.f32.mrb[0].mxu0
        %v835 = vadd.f32 %v433, %v834
        %836 = vmatprep.mubr.f32.mxu0 0.0
        %837 = vmatmul.mubr.f32.gmra.mrb[0].mxu0 %v384
        %v838 = vpop.f32.mrb[0].mxu0
        %v839 = vadd.f32 %v429, %v838
        %v840 = vpop.f32.mrb[0].mxu0
        %v841 = vadd.f32 %v433, %v840
        %842 = vmatprep.mubr.f32.mxu0 0.0
        %843 = vmatmul.mubr.f32.gmra.mrb[0].mxu0 %v385
        %v844 = vpop.f32.mrb[0].mxu0
        %v845 = vadd.f32 %v429, %v844
        %v846 = vpop.f32.mrb[0].mxu0
        %v847 = vadd.f32 %v433, %v846
        %848 = vmatprep.mubr.f32.mxu0 0.0
        %849 = vmatmul.mubr.f32.gmra.mrb[0].mxu0 %v386
        %v850 = vpop.f32.mrb[0].mxu0
        %v851 = vadd.f32 %v429, %v850
        %v852 = vpop.f32.mrb[0].mxu0
        %v853 = vadd.f32 %v433, %v852
        %854 = vmatprep.mubr.f32.mxu0 0.0
        %855 = vmatmul.mubr.f32.gmra.mrb[0].mxu0 %v387
        %v856 = vpop.f32.mrb[0].mxu0
        %v857 = vadd.f32 %v429, %v856
        %v858 = vpop.f32.mrb[0].mxu0
        %v859 = vadd.f32 %v433, %v858
        %860 = vmatprep.mubr.f32.mxu0 0.0
        %861 = vmatmul.mubr.f32.gmra.mrb[0].mxu0 %v388
        %v862 = vpop.f32.mrb[0].mxu0
        %v863 = vadd.f32 %v429, %v862
        %v864 = vpop.f32.mrb[0].mxu0
        %v865 = vadd.f32 %v433, %v864
        %866 = vmatprep.mubr.f32.mxu0 0.0
        %867 = vmatmul.mubr.f32.gmra.mrb[0].mxu0 %v389
        %v868 = vpop.f32.mrb[0].mxu0
        %v869 = vadd.f32 %v429, %v868
        %v870 = vpop.f32.mrb[0].mxu0
        %v871 = vadd.f32 %v433, %v870
        %872 = vmatprep.mubr.f32.mxu0 0.0
        %873 = vmatmul.mubr.f32.gmra.mrb[0].mxu0 %v390
        %v874 = vpop.f32.mrb[0].mxu0
        %v875 = vadd.f32 %v429, %v874
        %v876 = vpop.f32.mrb[0].mxu0
        %v877 = vadd.f32 %v433, %v876
        %878 = vmatprep.mubr.f32.mxu0 0.0
        %879 = vmatmul.mubr.f32.gmra.mrb[0].mxu0 %v391
        %v880 = vpop.f32.mrb[0].mxu0
        %v881 = vadd.f32 %v429, %v880
        %v882 = vpop.f32.mrb[0].mxu0
        %v883 = vadd.f32 %v433, %v882
        %884 = vdwg.mxu0
        %v885 = vmax.f32 %v503, 0.0
        %v886 = vmax.f32 %v505, 0.0
        %v887 = vmax.f32 %v509, 0.0
        %v888 = vmax.f32 %v511, 0.0
        %v889 = vmax.f32 %v515, 0.0
        %v890 = vmax.f32 %v517, 0.0
        %v891 = vmax.f32 %v521, 0.0
        %v892 = vmax.f32 %v523, 0.0
        %v893 = vmax.f32 %v527, 0.0
        %v894 = vmax.f32 %v529, 0.0
        %v895 = vmax.f32 %v533, 0.0
        %v896 = vmax.f32 %v535, 0.0
        %v897 = vmax.f32 %v539, 0.0
        %v898 = vmax.f32 %v541, 0.0
        %v899 = vmax.f32 %v545, 0.0
        %v900 = vmax.f32 %v547, 0.0
        %v901 = vmax.f32 %v551, 0.0
        %v902 = vmax.f32 %v553, 0.0
        %v903 = vmax.f32 %v557, 0.0
        %v904 = vmax.f32 %v559, 0.0
        %v905 = vmax.f32 %v563, 0.0
        %v906 = vmax.f32 %v565, 0.0
        %v907 = vmax.f32 %v569, 0.0
        %v908 = vmax.f32 %v571, 0.0
        %v909 = vmax.f32 %v575, 0.0
        %v910 = vmax.f32 %v577, 0.0
        %v911 = vmax.f32 %v581, 0.0
        %v912 = vmax.f32 %v583, 0.0
        %v913 = vmax.f32 %v587, 0.0
        %v914 = vmax.f32 %v589, 0.0
        %v915 = vmax.f32 %v593, 0.0
        %v916 = vmax.f32 %v595, 0.0
        %v917 = vmax.f32 %v599, 0.0
        %v918 = vmax.f32 %v601, 0.0
        %v919 = vmax.f32 %v605, 0.0
        %v920 = vmax.f32 %v607, 0.0
        %v921 = vmax.f32 %v611, 0.0
        %v922 = vmax.f32 %v613, 0.0
        %v923 = vmax.f32 %v617, 0.0
        %v924 = vmax.f32 %v619, 0.0
        %v925 = vmax.f32 %v623, 0.0
        %v926 = vmax.f32 %v625, 0.0
        %v927 = vmax.f32 %v629, 0.0
        %v928 = vmax.f32 %v631, 0.0
        %v929 = vmax.f32 %v635, 0.0
        %v930 = vmax.f32 %v637, 0.0
        %v931 = vmax.f32 %v641, 0.0
        %v932 = vmax.f32 %v643, 0.0
        %v933 = vmax.f32 %v647, 0.0
        %v934 = vmax.f32 %v649, 0.0
        %v935 = vmax.f32 %v653, 0.0
        %v936 = vmax.f32 %v655, 0.0
        %v937 = vmax.f32 %v659, 0.0
        %v938 = vmax.f32 %v661, 0.0
        %v939 = vmax.f32 %v665, 0.0
        %v940 = vmax.f32 %v667, 0.0
        %v941 = vmax.f32 %v671, 0.0
        %v942 = vmax.f32 %v673, 0.0
        %v943 = vmax.f32 %v677, 0.0
        %v944 = vmax.f32 %v679, 0.0
        %v945 = vmax.f32 %v683, 0.0
        %v946 = vmax.f32 %v685, 0.0
        %v947 = vmax.f32 %v689, 0.0
        %v948 = vmax.f32 %v691, 0.0
        %v949 = vmax.f32 %v695, 0.0
        %v950 = vmax.f32 %v697, 0.0
        %v951 = vmax.f32 %v701, 0.0
        %v952 = vmax.f32 %v703, 0.0
        %v953 = vmax.f32 %v707, 0.0
        %v954 = vmax.f32 %v709, 0.0
        %v955 = vmax.f32 %v713, 0.0
        %v956 = vmax.f32 %v715, 0.0
        %v957 = vmax.f32 %v719, 0.0
        %v958 = vmax.f32 %v721, 0.0
        %v959 = vmax.f32 %v725, 0.0
        %v960 = vmax.f32 %v727, 0.0
        %v961 = vmax.f32 %v731, 0.0
        %v962 = vmax.f32 %v733, 0.0
        %v963 = vmax.f32 %v737, 0.0
        %v964 = vmax.f32 %v739, 0.0
        %v965 = vmax.f32 %v743, 0.0
        %v966 = vmax.f32 %v745, 0.0
        %v967 = vmax.f32 %v749, 0.0
        %v968 = vmax.f32 %v751, 0.0
        %v969 = vmax.f32 %v755, 0.0
        %v970 = vmax.f32 %v757, 0.0
        %v971 = vmax.f32 %v761, 0.0
        %v972 = vmax.f32 %v763, 0.0
        %v973 = vmax.f32 %v767, 0.0
        %v974 = vmax.f32 %v769, 0.0
        %v975 = vmax.f32 %v773, 0.0
        %v976 = vmax.f32 %v775, 0.0
        %v977 = vmax.f32 %v779, 0.0
        %v978 = vmax.f32 %v781, 0.0
        %v979 = vmax.f32 %v785, 0.0
        %v980 = vmax.f32 %v787, 0.0
        %v981 = vmax.f32 %v791, 0.0
        %v982 = vmax.f32 %v793, 0.0
        %v983 = vmax.f32 %v797, 0.0
        %v984 = vmax.f32 %v799, 0.0
        %v985 = vmax.f32 %v803, 0.0
        %v986 = vmax.f32 %v805, 0.0
        %v987 = vmax.f32 %v809, 0.0
        %v988 = vmax.f32 %v811, 0.0
        %v989 = vmax.f32 %v815, 0.0
        %v990 = vmax.f32 %v817, 0.0
        %v991 = vmax.f32 %v821, 0.0
        %v992 = vmax.f32 %v823, 0.0
        %v993 = vmax.f32 %v827, 0.0
        %v994 = vmax.f32 %v829, 0.0
        %v995 = vmax.f32 %v833, 0.0
        %v996 = vmax.f32 %v835, 0.0
        %v997 = vmax.f32 %v839, 0.0
        %v998 = vmax.f32 %v841, 0.0
        %v999 = vmax.f32 %v845, 0.0
        %v1000 = vmax.f32 %v847, 0.0
        %v1001 = vmax.f32 %v851, 0.0
        %v1002 = vmax.f32 %v853, 0.0
        %v1003 = vmax.f32 %v857, 0.0
        %v1004 = vmax.f32 %v859, 0.0
        %v1005 = vmax.f32 %v863, 0.0
        %v1006 = vmax.f32 %v865, 0.0
        %v1007 = vmax.f32 %v869, 0.0
        %v1008 = vmax.f32 %v871, 0.0
        %v1009 = vmax.f32 %v875, 0.0
        %v1010 = vmax.f32 %v877, 0.0
        %v1011 = vmax.f32 %v881, 0.0
        %v1012 = vmax.f32 %v883, 0.0
        %v1013 = vld [vmem:[#allocation7] sm:$0xff]
        %v1014 = vld [vmem:[#allocation7 + $0x8] sm:$0xff]
        %v1015 = vld [vmem:[#allocation7 + $0x10] sm:$0xff]
        %v1016 = vld [vmem:[#allocation7 + $0x18] sm:$0xff]
        %v1017 = vld [vmem:[#allocation7 + $0x20] sm:$0xff]
        %v1018 = vld [vmem:[#allocation7 + $0x28] sm:$0xff]
        %v1019 = vld [vmem:[#allocation7 + $0x30] sm:$0xff]
        %v1020 = vld [vmem:[#allocation7 + $0x38] sm:$0xff]
        %v1021 = vld [vmem:[#allocation7 + $0x40] sm:$0xff]
        %v1022 = vld [vmem:[#allocation7 + $0x48] sm:$0xff]
        %v1023 = vld [vmem:[#allocation7 + $0x50] sm:$0xff]
        %v1024 = vld [vmem:[#allocation7 + $0x58] sm:$0xff]
        %v1025 = vld [vmem:[#allocation7 + $0x60] sm:$0xff]
        %v1026 = vld [vmem:[#allocation7 + $0x68] sm:$0xff]
        %v1027 = vld [vmem:[#allocation7 + $0x70] sm:$0xff]
        %v1028 = vld [vmem:[#allocation7 + $0x78] sm:$0xff]
        %v1029 = vld [vmem:[#allocation7 + $0x80] sm:$0xff]
        %v1030 = vld [vmem:[#allocation7 + $0x88] sm:$0xff]
        %v1031 = vld [vmem:[#allocation7 + $0x90] sm:$0xff]
        %v1032 = vld [vmem:[#allocation7 + $0x98] sm:$0xff]
        %v1033 = vld [vmem:[#allocation7 + $0xa0] sm:$0xff]
        %v1034 = vld [vmem:[#allocation7 + $0xa8] sm:$0xff]
        %v1035 = vld [vmem:[#allocation7 + $0xb0] sm:$0xff]
        %v1036 = vld [vmem:[#allocation7 + $0xb8] sm:$0xff]
        %v1037 = vld [vmem:[#allocation7 + $0xc0] sm:$0xff]
        %v1038 = vld [vmem:[#allocation7 + $0xc8] sm:$0xff]
        %v1039 = vld [vmem:[#allocation7 + $0xd0] sm:$0xff]
        %v1040 = vld [vmem:[#allocation7 + $0xd8] sm:$0xff]
        %v1041 = vld [vmem:[#allocation7 + $0xe0] sm:$0xff]
        %v1042 = vld [vmem:[#allocation7 + $0xe8] sm:$0xff]
        %v1043 = vld [vmem:[#allocation7 + $0xf0] sm:$0xff]
        %v1044 = vld [vmem:[#allocation7 + $0xf8] sm:$0xff]
        %v1045 = vld [vmem:[%s4] sm:$0x1]
        %v1047 = vlaneseq
        %v1048 = vshrl.u32 %v1047, 7
        %v1049 = vsub.s32 0, %v1048
        %v1050 = vrot.slane %v1045, %v1049
        %1052 = vmatprep.subr.mxu0 0.0
        %1053 = vmatpush1.msra.mxu0 %v1013
        %1054 = vmatprep.subr.mxu0 0.0
        %1055 = vmatpush1.msra.mxu0 %v1014
        %1056 = vmatprep.subr.mxu0 0.0
        %1057 = vmatpush1.msra.mxu0 %v1015
        %1058 = vmatprep.subr.mxu0 0.0
        %1059 = vmatpush1.msra.mxu0 %v1016
        %1060 = vmatprep.subr.mxu0 0.0
        %1061 = vmatpush1.msra.mxu0 %v1017
        %1062 = vmatprep.subr.mxu0 0.0
        %1063 = vmatpush1.msra.mxu0 %v1018
        %1064 = vmatprep.subr.mxu0 0.0
        %1065 = vmatpush1.msra.mxu0 %v1019
        %1066 = vmatprep.subr.mxu0 0.0
        %1067 = vmatpush1.msra.mxu0 %v1020
        %1068 = vmatprep.subr.mxu0 0.0
        %1069 = vmatpush1.msra.mxu0 %v1021
        %1070 = vmatprep.subr.mxu0 0.0
        %1071 = vmatpush1.msra.mxu0 %v1022
        %1072 = vmatprep.subr.mxu0 0.0
        %1073 = vmatpush1.msra.mxu0 %v1023
        %1074 = vmatprep.subr.mxu0 0.0
        %1075 = vmatpush1.msra.mxu0 %v1024
        %1076 = vmatprep.subr.mxu0 0.0
        %1077 = vmatpush1.msra.mxu0 %v1025
        %1078 = vmatprep.subr.mxu0 0.0
        %1079 = vmatpush1.msra.mxu0 %v1026
        %1080 = vmatprep.subr.mxu0 0.0
        %1081 = vmatpush1.msra.mxu0 %v1027
        %1082 = vmatprep.subr.mxu0 0.0
        %1083 = vmatpush1.msra.mxu0 %v1028
        %1084 = vmatprep.subr.mxu0 0.0
        %1085 = vmatpush1.msra.mxu0 %v1029
        %1086 = vmatprep.subr.mxu0 0.0
        %1087 = vmatpush1.msra.mxu0 %v1030
        %1088 = vmatprep.subr.mxu0 0.0
        %1089 = vmatpush1.msra.mxu0 %v1031
        %1090 = vmatprep.subr.mxu0 0.0
        %1091 = vmatpush1.msra.mxu0 %v1032
        %1092 = vmatprep.subr.mxu0 0.0
        %1093 = vmatpush1.msra.mxu0 %v1033
        %1094 = vmatprep.subr.mxu0 0.0
        %1095 = vmatpush1.msra.mxu0 %v1034
        %1096 = vmatprep.subr.mxu0 0.0
        %1097 = vmatpush1.msra.mxu0 %v1035
        %1098 = vmatprep.subr.mxu0 0.0
        %1099 = vmatpush1.msra.mxu0 %v1036
        %1100 = vmatprep.subr.mxu0 0.0
        %1101 = vmatpush1.msra.mxu0 %v1037
        %1102 = vmatprep.subr.mxu0 0.0
        %1103 = vmatpush1.msra.mxu0 %v1038
        %1104 = vmatprep.subr.mxu0 0.0
        %1105 = vmatpush1.msra.mxu0 %v1039
        %1106 = vmatprep.subr.mxu0 0.0
        %1107 = vmatpush1.msra.mxu0 %v1040
        %1108 = vmatprep.subr.mxu0 0.0
        %1109 = vmatpush1.msra.mxu0 %v1041
        %1110 = vmatprep.subr.mxu0 0.0
        %1111 = vmatpush1.msra.mxu0 %v1042
        %1112 = vmatprep.subr.mxu0 0.0
        %1113 = vmatpush1.msra.mxu0 %v1043
        %1114 = vmatprep.subr.mxu0 0.0
        %1115 = vmatpush1.msra.mxu0 %v1044
        %1116 = vmatprep.mubr.f32.mxu0 %v886
        %1117 = vmatmul.mubr.f32.gmra.mrb[0].mxu0 %v885
        %v1118 = vpop.f32.mrb[0].mxu0
        %v1119 = vadd.f32 %v1050, %v1118
        %v1120 = vpop.f32.mrb[0].mxu0
        %1121 = vmatprep.mubr.f32.mxu0 %v888
        %1122 = vmatmul.mubr.f32.gmra.mrb[0].mxu0 %v887
        %v1123 = vpop.f32.mrb[0].mxu0
        %v1124 = vadd.f32 %v1050, %v1123
        %v1125 = vpop.f32.mrb[0].mxu0
        %1126 = vmatprep.mubr.f32.mxu0 %v890
        %1127 = vmatmul.mubr.f32.gmra.mrb[0].mxu0 %v889
        %v1128 = vpop.f32.mrb[0].mxu0
        %v1129 = vadd.f32 %v1050, %v1128
        %v1130 = vpop.f32.mrb[0].mxu0
        %1131 = vmatprep.mubr.f32.mxu0 %v892
        %1132 = vmatmul.mubr.f32.gmra.mrb[0].mxu0 %v891
        %v1133 = vpop.f32.mrb[0].mxu0
        %v1134 = vadd.f32 %v1050, %v1133
        %v1135 = vpop.f32.mrb[0].mxu0
        %1136 = vmatprep.mubr.f32.mxu0 %v894
        %1137 = vmatmul.mubr.f32.gmra.mrb[0].mxu0 %v893
        %v1138 = vpop.f32.mrb[0].mxu0
        %v1139 = vadd.f32 %v1050, %v1138
        %v1140 = vpop.f32.mrb[0].mxu0
        %1141 = vmatprep.mubr.f32.mxu0 %v896
        %1142 = vmatmul.mubr.f32.gmra.mrb[0].mxu0 %v895
        %v1143 = vpop.f32.mrb[0].mxu0
        %v1144 = vadd.f32 %v1050, %v1143
        %v1145 = vpop.f32.mrb[0].mxu0
        %1146 = vmatprep.mubr.f32.mxu0 %v898
        %1147 = vmatmul.mubr.f32.gmra.mrb[0].mxu0 %v897
        %v1148 = vpop.f32.mrb[0].mxu0
        %v1149 = vadd.f32 %v1050, %v1148
        %v1150 = vpop.f32.mrb[0].mxu0
        %1151 = vmatprep.mubr.f32.mxu0 %v900
        %1152 = vmatmul.mubr.f32.gmra.mrb[0].mxu0 %v899
        %v1153 = vpop.f32.mrb[0].mxu0
        %v1154 = vadd.f32 %v1050, %v1153
        %v1155 = vpop.f32.mrb[0].mxu0
        %1156 = vmatprep.mubr.f32.mxu0 %v902
        %1157 = vmatmul.mubr.f32.gmra.mrb[0].mxu0 %v901
        %v1158 = vpop.f32.mrb[0].mxu0
        %v1159 = vadd.f32 %v1050, %v1158
        %v1160 = vpop.f32.mrb[0].mxu0
        %1161 = vmatprep.mubr.f32.mxu0 %v904
        %1162 = vmatmul.mubr.f32.gmra.mrb[0].mxu0 %v903
        %v1163 = vpop.f32.mrb[0].mxu0
        %v1164 = vadd.f32 %v1050, %v1163
        %v1165 = vpop.f32.mrb[0].mxu0
        %1166 = vmatprep.mubr.f32.mxu0 %v906
        %1167 = vmatmul.mubr.f32.gmra.mrb[0].mxu0 %v905
        %v1168 = vpop.f32.mrb[0].mxu0
        %v1169 = vadd.f32 %v1050, %v1168
        %v1170 = vpop.f32.mrb[0].mxu0
        %1171 = vmatprep.mubr.f32.mxu0 %v908
        %1172 = vmatmul.mubr.f32.gmra.mrb[0].mxu0 %v907
        %v1173 = vpop.f32.mrb[0].mxu0
        %v1174 = vadd.f32 %v1050, %v1173
        %v1175 = vpop.f32.mrb[0].mxu0
        %1176 = vmatprep.mubr.f32.mxu0 %v910
        %1177 = vmatmul.mubr.f32.gmra.mrb[0].mxu0 %v909
        %v1178 = vpop.f32.mrb[0].mxu0
        %v1179 = vadd.f32 %v1050, %v1178
        %v1180 = vpop.f32.mrb[0].mxu0
        %1181 = vmatprep.mubr.f32.mxu0 %v912
        %1182 = vmatmul.mubr.f32.gmra.mrb[0].mxu0 %v911
        %v1183 = vpop.f32.mrb[0].mxu0
        %v1184 = vadd.f32 %v1050, %v1183
        %v1185 = vpop.f32.mrb[0].mxu0
        %1186 = vmatprep.mubr.f32.mxu0 %v914
        %1187 = vmatmul.mubr.f32.gmra.mrb[0].mxu0 %v913
        %v1188 = vpop.f32.mrb[0].mxu0
        %v1189 = vadd.f32 %v1050, %v1188
        %v1190 = vpop.f32.mrb[0].mxu0
        %1191 = vmatprep.mubr.f32.mxu0 %v916
        %1192 = vmatmul.mubr.f32.gmra.mrb[0].mxu0 %v915
        %v1193 = vpop.f32.mrb[0].mxu0
        %v1194 = vadd.f32 %v1050, %v1193
        %v1195 = vpop.f32.mrb[0].mxu0
        %1196 = vmatprep.mubr.f32.mxu0 %v918
        %1197 = vmatmul.mubr.f32.gmra.mrb[0].mxu0 %v917
        %v1198 = vpop.f32.mrb[0].mxu0
        %v1199 = vadd.f32 %v1050, %v1198
        %v1200 = vpop.f32.mrb[0].mxu0
        %1201 = vmatprep.mubr.f32.mxu0 %v920
        %1202 = vmatmul.mubr.f32.gmra.mrb[0].mxu0 %v919
        %v1203 = vpop.f32.mrb[0].mxu0
        %v1204 = vadd.f32 %v1050, %v1203
        %v1205 = vpop.f32.mrb[0].mxu0
        %1206 = vmatprep.mubr.f32.mxu0 %v922
        %1207 = vmatmul.mubr.f32.gmra.mrb[0].mxu0 %v921
        %v1208 = vpop.f32.mrb[0].mxu0
        %v1209 = vadd.f32 %v1050, %v1208
        %v1210 = vpop.f32.mrb[0].mxu0
        %1211 = vmatprep.mubr.f32.mxu0 %v924
        %1212 = vmatmul.mubr.f32.gmra.mrb[0].mxu0 %v923
        %v1213 = vpop.f32.mrb[0].mxu0
        %v1214 = vadd.f32 %v1050, %v1213
        %v1215 = vpop.f32.mrb[0].mxu0
        %1216 = vmatprep.mubr.f32.mxu0 %v926
        %1217 = vmatmul.mubr.f32.gmra.mrb[0].mxu0 %v925
        %v1218 = vpop.f32.mrb[0].mxu0
        %v1219 = vadd.f32 %v1050, %v1218
        %v1220 = vpop.f32.mrb[0].mxu0
        %1221 = vmatprep.mubr.f32.mxu0 %v928
        %1222 = vmatmul.mubr.f32.gmra.mrb[0].mxu0 %v927
        %v1223 = vpop.f32.mrb[0].mxu0
        %v1224 = vadd.f32 %v1050, %v1223
        %v1225 = vpop.f32.mrb[0].mxu0
        %1226 = vmatprep.mubr.f32.mxu0 %v930
        %1227 = vmatmul.mubr.f32.gmra.mrb[0].mxu0 %v929
        %v1228 = vpop.f32.mrb[0].mxu0
        %v1229 = vadd.f32 %v1050, %v1228
        %v1230 = vpop.f32.mrb[0].mxu0
        %1231 = vmatprep.mubr.f32.mxu0 %v932
        %1232 = vmatmul.mubr.f32.gmra.mrb[0].mxu0 %v931
        %v1233 = vpop.f32.mrb[0].mxu0
        %v1234 = vadd.f32 %v1050, %v1233
        %v1235 = vpop.f32.mrb[0].mxu0
        %1236 = vmatprep.mubr.f32.mxu0 %v934
        %1237 = vmatmul.mubr.f32.gmra.mrb[0].mxu0 %v933
        %v1238 = vpop.f32.mrb[0].mxu0
        %v1239 = vadd.f32 %v1050, %v1238
        %v1240 = vpop.f32.mrb[0].mxu0
        %1241 = vmatprep.mubr.f32.mxu0 %v936
        %1242 = vmatmul.mubr.f32.gmra.mrb[0].mxu0 %v935
        %v1243 = vpop.f32.mrb[0].mxu0
        %v1244 = vadd.f32 %v1050, %v1243
        %v1245 = vpop.f32.mrb[0].mxu0
        %1246 = vmatprep.mubr.f32.mxu0 %v938
        %1247 = vmatmul.mubr.f32.gmra.mrb[0].mxu0 %v937
        %v1248 = vpop.f32.mrb[0].mxu0
        %v1249 = vadd.f32 %v1050, %v1248
        %v1250 = vpop.f32.mrb[0].mxu0
        %1251 = vmatprep.mubr.f32.mxu0 %v940
        %1252 = vmatmul.mubr.f32.gmra.mrb[0].mxu0 %v939
        %v1253 = vpop.f32.mrb[0].mxu0
        %v1254 = vadd.f32 %v1050, %v1253
        %v1255 = vpop.f32.mrb[0].mxu0
        %1256 = vmatprep.mubr.f32.mxu0 %v942
        %1257 = vmatmul.mubr.f32.gmra.mrb[0].mxu0 %v941
        %v1258 = vpop.f32.mrb[0].mxu0
        %v1259 = vadd.f32 %v1050, %v1258
        %v1260 = vpop.f32.mrb[0].mxu0
        %1261 = vmatprep.mubr.f32.mxu0 %v944
        %1262 = vmatmul.mubr.f32.gmra.mrb[0].mxu0 %v943
        %v1263 = vpop.f32.mrb[0].mxu0
        %v1264 = vadd.f32 %v1050, %v1263
        %v1265 = vpop.f32.mrb[0].mxu0
        %1266 = vmatprep.mubr.f32.mxu0 %v946
        %1267 = vmatmul.mubr.f32.gmra.mrb[0].mxu0 %v945
        %v1268 = vpop.f32.mrb[0].mxu0
        %v1269 = vadd.f32 %v1050, %v1268
        %v1270 = vpop.f32.mrb[0].mxu0
        %1271 = vmatprep.mubr.f32.mxu0 %v948
        %1272 = vmatmul.mubr.f32.gmra.mrb[0].mxu0 %v947
        %v1273 = vpop.f32.mrb[0].mxu0
        %v1274 = vadd.f32 %v1050, %v1273
        %v1275 = vpop.f32.mrb[0].mxu0
        %1276 = vmatprep.mubr.f32.mxu0 %v950
        %1277 = vmatmul.mubr.f32.gmra.mrb[0].mxu0 %v949
        %v1278 = vpop.f32.mrb[0].mxu0
        %v1279 = vadd.f32 %v1050, %v1278
        %v1280 = vpop.f32.mrb[0].mxu0
        %1281 = vmatprep.mubr.f32.mxu0 %v952
        %1282 = vmatmul.mubr.f32.gmra.mrb[0].mxu0 %v951
        %v1283 = vpop.f32.mrb[0].mxu0
        %v1284 = vadd.f32 %v1050, %v1283
        %v1285 = vpop.f32.mrb[0].mxu0
        %1286 = vmatprep.mubr.f32.mxu0 %v954
        %1287 = vmatmul.mubr.f32.gmra.mrb[0].mxu0 %v953
        %v1288 = vpop.f32.mrb[0].mxu0
        %v1289 = vadd.f32 %v1050, %v1288
        %v1290 = vpop.f32.mrb[0].mxu0
        %1291 = vmatprep.mubr.f32.mxu0 %v956
        %1292 = vmatmul.mubr.f32.gmra.mrb[0].mxu0 %v955
        %v1293 = vpop.f32.mrb[0].mxu0
        %v1294 = vadd.f32 %v1050, %v1293
        %v1295 = vpop.f32.mrb[0].mxu0
        %1296 = vmatprep.mubr.f32.mxu0 %v958
        %1297 = vmatmul.mubr.f32.gmra.mrb[0].mxu0 %v957
        %v1298 = vpop.f32.mrb[0].mxu0
        %v1299 = vadd.f32 %v1050, %v1298
        %v1300 = vpop.f32.mrb[0].mxu0
        %1301 = vmatprep.mubr.f32.mxu0 %v960
        %1302 = vmatmul.mubr.f32.gmra.mrb[0].mxu0 %v959
        %v1303 = vpop.f32.mrb[0].mxu0
        %v1304 = vadd.f32 %v1050, %v1303
        %v1305 = vpop.f32.mrb[0].mxu0
        %1306 = vmatprep.mubr.f32.mxu0 %v962
        %1307 = vmatmul.mubr.f32.gmra.mrb[0].mxu0 %v961
        %v1308 = vpop.f32.mrb[0].mxu0
        %v1309 = vadd.f32 %v1050, %v1308
        %v1310 = vpop.f32.mrb[0].mxu0
        %1311 = vmatprep.mubr.f32.mxu0 %v964
        %1312 = vmatmul.mubr.f32.gmra.mrb[0].mxu0 %v963
        %v1313 = vpop.f32.mrb[0].mxu0
        %v1314 = vadd.f32 %v1050, %v1313
        %v1315 = vpop.f32.mrb[0].mxu0
        %1316 = vmatprep.mubr.f32.mxu0 %v966
        %1317 = vmatmul.mubr.f32.gmra.mrb[0].mxu0 %v965
        %v1318 = vpop.f32.mrb[0].mxu0
        %v1319 = vadd.f32 %v1050, %v1318
        %v1320 = vpop.f32.mrb[0].mxu0
        %1321 = vmatprep.mubr.f32.mxu0 %v968
        %1322 = vmatmul.mubr.f32.gmra.mrb[0].mxu0 %v967
        %v1323 = vpop.f32.mrb[0].mxu0
        %v1324 = vadd.f32 %v1050, %v1323
        %v1325 = vpop.f32.mrb[0].mxu0
        %1326 = vmatprep.mubr.f32.mxu0 %v970
        %1327 = vmatmul.mubr.f32.gmra.mrb[0].mxu0 %v969
        %v1328 = vpop.f32.mrb[0].mxu0
        %v1329 = vadd.f32 %v1050, %v1328
        %v1330 = vpop.f32.mrb[0].mxu0
        %1331 = vmatprep.mubr.f32.mxu0 %v972
        %1332 = vmatmul.mubr.f32.gmra.mrb[0].mxu0 %v971
        %v1333 = vpop.f32.mrb[0].mxu0
        %v1334 = vadd.f32 %v1050, %v1333
        %v1335 = vpop.f32.mrb[0].mxu0
        %1336 = vmatprep.mubr.f32.mxu0 %v974
        %1337 = vmatmul.mubr.f32.gmra.mrb[0].mxu0 %v973
        %v1338 = vpop.f32.mrb[0].mxu0
        %v1339 = vadd.f32 %v1050, %v1338
        %v1340 = vpop.f32.mrb[0].mxu0
        %1341 = vmatprep.mubr.f32.mxu0 %v976
        %1342 = vmatmul.mubr.f32.gmra.mrb[0].mxu0 %v975
        %v1343 = vpop.f32.mrb[0].mxu0
        %v1344 = vadd.f32 %v1050, %v1343
        %v1345 = vpop.f32.mrb[0].mxu0
        %1346 = vmatprep.mubr.f32.mxu0 %v978
        %1347 = vmatmul.mubr.f32.gmra.mrb[0].mxu0 %v977
        %v1348 = vpop.f32.mrb[0].mxu0
        %v1349 = vadd.f32 %v1050, %v1348
        %v1350 = vpop.f32.mrb[0].mxu0
        %1351 = vmatprep.mubr.f32.mxu0 %v980
        %1352 = vmatmul.mubr.f32.gmra.mrb[0].mxu0 %v979
        %v1353 = vpop.f32.mrb[0].mxu0
        %v1354 = vadd.f32 %v1050, %v1353
        %v1355 = vpop.f32.mrb[0].mxu0
        %1356 = vmatprep.mubr.f32.mxu0 %v982
        %1357 = vmatmul.mubr.f32.gmra.mrb[0].mxu0 %v981
        %v1358 = vpop.f32.mrb[0].mxu0
        %v1359 = vadd.f32 %v1050, %v1358
        %v1360 = vpop.f32.mrb[0].mxu0
        %1361 = vmatprep.mubr.f32.mxu0 %v984
        %1362 = vmatmul.mubr.f32.gmra.mrb[0].mxu0 %v983
        %v1363 = vpop.f32.mrb[0].mxu0
        %v1364 = vadd.f32 %v1050, %v1363
        %v1365 = vpop.f32.mrb[0].mxu0
        %1366 = vmatprep.mubr.f32.mxu0 %v986
        %1367 = vmatmul.mubr.f32.gmra.mrb[0].mxu0 %v985
        %v1368 = vpop.f32.mrb[0].mxu0
        %v1369 = vadd.f32 %v1050, %v1368
        %v1370 = vpop.f32.mrb[0].mxu0
        %1371 = vmatprep.mubr.f32.mxu0 %v988
        %1372 = vmatmul.mubr.f32.gmra.mrb[0].mxu0 %v987
        %v1373 = vpop.f32.mrb[0].mxu0
        %v1374 = vadd.f32 %v1050, %v1373
        %v1375 = vpop.f32.mrb[0].mxu0
        %1376 = vmatprep.mubr.f32.mxu0 %v990
        %1377 = vmatmul.mubr.f32.gmra.mrb[0].mxu0 %v989
        %v1378 = vpop.f32.mrb[0].mxu0
        %v1379 = vadd.f32 %v1050, %v1378
        %v1380 = vpop.f32.mrb[0].mxu0
        %1381 = vmatprep.mubr.f32.mxu0 %v992
        %1382 = vmatmul.mubr.f32.gmra.mrb[0].mxu0 %v991
        %v1383 = vpop.f32.mrb[0].mxu0
        %v1384 = vadd.f32 %v1050, %v1383
        %v1385 = vpop.f32.mrb[0].mxu0
        %1386 = vmatprep.mubr.f32.mxu0 %v994
        %1387 = vmatmul.mubr.f32.gmra.mrb[0].mxu0 %v993
        %v1388 = vpop.f32.mrb[0].mxu0
        %v1389 = vadd.f32 %v1050, %v1388
        %v1390 = vpop.f32.mrb[0].mxu0
        %1391 = vmatprep.mubr.f32.mxu0 %v996
        %1392 = vmatmul.mubr.f32.gmra.mrb[0].mxu0 %v995
        %v1393 = vpop.f32.mrb[0].mxu0
        %v1394 = vadd.f32 %v1050, %v1393
        %v1395 = vpop.f32.mrb[0].mxu0
        %1396 = vmatprep.mubr.f32.mxu0 %v998
        %1397 = vmatmul.mubr.f32.gmra.mrb[0].mxu0 %v997
        %v1398 = vpop.f32.mrb[0].mxu0
        %v1399 = vadd.f32 %v1050, %v1398
        %v1400 = vpop.f32.mrb[0].mxu0
        %1401 = vmatprep.mubr.f32.mxu0 %v1000
        %1402 = vmatmul.mubr.f32.gmra.mrb[0].mxu0 %v999
        %v1403 = vpop.f32.mrb[0].mxu0
        %v1404 = vadd.f32 %v1050, %v1403
        %v1405 = vpop.f32.mrb[0].mxu0
        %1406 = vmatprep.mubr.f32.mxu0 %v1002
        %1407 = vmatmul.mubr.f32.gmra.mrb[0].mxu0 %v1001
        %v1408 = vpop.f32.mrb[0].mxu0
        %v1409 = vadd.f32 %v1050, %v1408
        %v1410 = vpop.f32.mrb[0].mxu0
        %1411 = vmatprep.mubr.f32.mxu0 %v1004
        %1412 = vmatmul.mubr.f32.gmra.mrb[0].mxu0 %v1003
        %v1413 = vpop.f32.mrb[0].mxu0
        %v1414 = vadd.f32 %v1050, %v1413
        %v1415 = vpop.f32.mrb[0].mxu0
        %1416 = vmatprep.mubr.f32.mxu0 %v1006
        %1417 = vmatmul.mubr.f32.gmra.mrb[0].mxu0 %v1005
        %v1418 = vpop.f32.mrb[0].mxu0
        %v1419 = vadd.f32 %v1050, %v1418
        %v1420 = vpop.f32.mrb[0].mxu0
        %1421 = vmatprep.mubr.f32.mxu0 %v1008
        %1422 = vmatmul.mubr.f32.gmra.mrb[0].mxu0 %v1007
        %v1423 = vpop.f32.mrb[0].mxu0
        %v1424 = vadd.f32 %v1050, %v1423
        %v1425 = vpop.f32.mrb[0].mxu0
        %1426 = vmatprep.mubr.f32.mxu0 %v1010
        %1427 = vmatmul.mubr.f32.gmra.mrb[0].mxu0 %v1009
        %v1428 = vpop.f32.mrb[0].mxu0
        %v1429 = vadd.f32 %v1050, %v1428
        %v1430 = vpop.f32.mrb[0].mxu0
        %1431 = vmatprep.mubr.f32.mxu0 %v1012
        %1432 = vmatmul.mubr.f32.gmra.mrb[0].mxu0 %v1011
        %v1433 = vpop.f32.mrb[0].mxu0
        %v1434 = vadd.f32 %v1050, %v1433
        %v1435 = vpop.f32.mrb[0].mxu0
        %1436 = vdwg.mxu0
        %v1437 = vld [vmem:[%s5] sm:$0x1]
        %v1438 = vld [vmem:[%s6] sm:$0x1]
        %v1439 = vadd.f32 %v328, %v1119
        %v1440 = vadd.f32 %v329, %v1124
        %v1441 = vadd.f32 %v330, %v1129
        %v1442 = vadd.f32 %v331, %v1134
        %v1443 = vadd.f32 %v332, %v1139
        %v1444 = vadd.f32 %v333, %v1144
        %v1445 = vadd.f32 %v334, %v1149
        %v1446 = vadd.f32 %v335, %v1154
        %v1447 = vadd.f32 %v336, %v1159
        %v1448 = vadd.f32 %v337, %v1164
        %v1449 = vadd.f32 %v338, %v1169
        %v1450 = vadd.f32 %v339, %v1174
        %v1451 = vadd.f32 %v340, %v1179
        %v1452 = vadd.f32 %v341, %v1184
        %v1453 = vadd.f32 %v342, %v1189
        %v1454 = vadd.f32 %v343, %v1194
        %v1455 = vadd.f32 %v344, %v1199
        %v1456 = vadd.f32 %v345, %v1204
        %v1457 = vadd.f32 %v346, %v1209
        %v1458 = vadd.f32 %v347, %v1214
        %v1459 = vadd.f32 %v348, %v1219
        %v1460 = vadd.f32 %v349, %v1224
        %v1461 = vadd.f32 %v350, %v1229
        %v1462 = vadd.f32 %v351, %v1234
        %v1463 = vadd.f32 %v352, %v1239
        %v1464 = vadd.f32 %v353, %v1244
        %v1465 = vadd.f32 %v354, %v1249
        %v1466 = vadd.f32 %v355, %v1254
        %v1467 = vadd.f32 %v356, %v1259
        %v1468 = vadd.f32 %v357, %v1264
        %v1469 = vadd.f32 %v358, %v1269
        %v1470 = vadd.f32 %v359, %v1274
        %v1471 = vadd.f32 %v360, %v1279
        %v1472 = vadd.f32 %v361, %v1284
        %v1473 = vadd.f32 %v362, %v1289
        %v1474 = vadd.f32 %v363, %v1294
        %v1475 = vadd.f32 %v364, %v1299
        %v1476 = vadd.f32 %v365, %v1304
        %v1477 = vadd.f32 %v366, %v1309
        %v1478 = vadd.f32 %v367, %v1314
        %v1479 = vadd.f32 %v368, %v1319
        %v1480 = vadd.f32 %v369, %v1324
        %v1481 = vadd.f32 %v370, %v1329
        %v1482 = vadd.f32 %v371, %v1334
        %v1483 = vadd.f32 %v372, %v1339
        %v1484 = vadd.f32 %v373, %v1344
        %v1485 = vadd.f32 %v374, %v1349
        %v1486 = vadd.f32 %v375, %v1354
        %v1487 = vadd.f32 %v376, %v1359
        %v1488 = vadd.f32 %v377, %v1364
        %v1489 = vadd.f32 %v378, %v1369
        %v1490 = vadd.f32 %v379, %v1374
        %v1491 = vadd.f32 %v380, %v1379
        %v1492 = vadd.f32 %v381, %v1384
        %v1493 = vadd.f32 %v382, %v1389
        %v1494 = vadd.f32 %v383, %v1394
        %v1495 = vadd.f32 %v384, %v1399
        %v1496 = vadd.f32 %v385, %v1404
        %v1497 = vadd.f32 %v386, %v1409
        %v1498 = vadd.f32 %v387, %v1414
        %v1499 = vadd.f32 %v388, %v1419
        %v1500 = vadd.f32 %v389, %v1424
        %v1501 = vadd.f32 %v390, %v1429
        %v1502 = vadd.f32 %v391, %v1434
        %1503 = vadd.xlane.f32.xlu0 %v1439
        %v1504 = vpop.xlane.xlu0 %1503
        %1505 = vadd.xlane.f32.xlu0 %v1440
        %v1506 = vpop.xlane.xlu0 %1505
        %1507 = vadd.xlane.f32.xlu0 %v1441
        %v1508 = vpop.xlane.xlu0 %1507
        %1509 = vadd.xlane.f32.xlu0 %v1442
        %v1510 = vpop.xlane.xlu0 %1509
        %1511 = vadd.xlane.f32.xlu0 %v1443
        %v1512 = vpop.xlane.xlu0 %1511
        %1513 = vadd.xlane.f32.xlu0 %v1444
        %v1514 = vpop.xlane.xlu0 %1513
        %1515 = vadd.xlane.f32.xlu0 %v1445
        %v1516 = vpop.xlane.xlu0 %1515
        %1517 = vadd.xlane.f32.xlu0 %v1446
        %v1518 = vpop.xlane.xlu0 %1517
        %1519 = vadd.xlane.f32.xlu0 %v1447
        %v1520 = vpop.xlane.xlu0 %1519
        %1521 = vadd.xlane.f32.xlu0 %v1448
        %v1522 = vpop.xlane.xlu0 %1521
        %1523 = vadd.xlane.f32.xlu0 %v1449
        %v1524 = vpop.xlane.xlu0 %1523
        %1525 = vadd.xlane.f32.xlu0 %v1450
        %v1526 = vpop.xlane.xlu0 %1525
        %1527 = vadd.xlane.f32.xlu0 %v1451
        %v1528 = vpop.xlane.xlu0 %1527
        %1529 = vadd.xlane.f32.xlu0 %v1452
        %v1530 = vpop.xlane.xlu0 %1529
        %1531 = vadd.xlane.f32.xlu0 %v1453
        %v1532 = vpop.xlane.xlu0 %1531
        %1533 = vadd.xlane.f32.xlu0 %v1454
        %v1534 = vpop.xlane.xlu0 %1533
        %1535 = vadd.xlane.f32.xlu0 %v1455
        %v1536 = vpop.xlane.xlu0 %1535
        %1537 = vadd.xlane.f32.xlu0 %v1456
        %v1538 = vpop.xlane.xlu0 %1537
        %1539 = vadd.xlane.f32.xlu0 %v1457
        %v1540 = vpop.xlane.xlu0 %1539
        %1541 = vadd.xlane.f32.xlu0 %v1458
        %v1542 = vpop.xlane.xlu0 %1541
        %1543 = vadd.xlane.f32.xlu0 %v1459
        %v1544 = vpop.xlane.xlu0 %1543
        %1545 = vadd.xlane.f32.xlu0 %v1460
        %v1546 = vpop.xlane.xlu0 %1545
        %1547 = vadd.xlane.f32.xlu0 %v1461
        %v1548 = vpop.xlane.xlu0 %1547
        %1549 = vadd.xlane.f32.xlu0 %v1462
        %v1550 = vpop.xlane.xlu0 %1549
        %1551 = vadd.xlane.f32.xlu0 %v1463
        %v1552 = vpop.xlane.xlu0 %1551
        %1553 = vadd.xlane.f32.xlu0 %v1464
        %v1554 = vpop.xlane.xlu0 %1553
        %1555 = vadd.xlane.f32.xlu0 %v1465
        %v1556 = vpop.xlane.xlu0 %1555
        %1557 = vadd.xlane.f32.xlu0 %v1466
        %v1558 = vpop.xlane.xlu0 %1557
        %1559 = vadd.xlane.f32.xlu0 %v1467
        %v1560 = vpop.xlane.xlu0 %1559
        %1561 = vadd.xlane.f32.xlu0 %v1468
        %v1562 = vpop.xlane.xlu0 %1561
        %1563 = vadd.xlane.f32.xlu0 %v1469
        %v1564 = vpop.xlane.xlu0 %1563
        %1565 = vadd.xlane.f32.xlu0 %v1470
        %v1566 = vpop.xlane.xlu0 %1565
        %1567 = vadd.xlane.f32.xlu0 %v1471
        %v1568 = vpop.xlane.xlu0 %1567
        %1569 = vadd.xlane.f32.xlu0 %v1472
        %v1570 = vpop.xlane.xlu0 %1569
        %1571 = vadd.xlane.f32.xlu0 %v1473
        %v1572 = vpop.xlane.xlu0 %1571
        %1573 = vadd.xlane.f32.xlu0 %v1474
        %v1574 = vpop.xlane.xlu0 %1573
        %1575 = vadd.xlane.f32.xlu0 %v1475
        %v1576 = vpop.xlane.xlu0 %1575
        %1577 = vadd.xlane.f32.xlu0 %v1476
        %v1578 = vpop.xlane.xlu0 %1577
        %1579 = vadd.xlane.f32.xlu0 %v1477
        %v1580 = vpop.xlane.xlu0 %1579
        %1581 = vadd.xlane.f32.xlu0 %v1478
        %v1582 = vpop.xlane.xlu0 %1581
        %1583 = vadd.xlane.f32.xlu0 %v1479
        %v1584 = vpop.xlane.xlu0 %1583
        %1585 = vadd.xlane.f32.xlu0 %v1480
        %v1586 = vpop.xlane.xlu0 %1585
        %1587 = vadd.xlane.f32.xlu0 %v1481
        %v1588 = vpop.xlane.xlu0 %1587
        %1589 = vadd.xlane.f32.xlu0 %v1482
        %v1590 = vpop.xlane.xlu0 %1589
        %1591 = vadd.xlane.f32.xlu0 %v1483
        %v1592 = vpop.xlane.xlu0 %1591
        %1593 = vadd.xlane.f32.xlu0 %v1484
        %v1594 = vpop.xlane.xlu0 %1593
        %1595 = vadd.xlane.f32.xlu0 %v1485
        %v1596 = vpop.xlane.xlu0 %1595
        %1597 = vadd.xlane.f32.xlu0 %v1486
        %v1598 = vpop.xlane.xlu0 %1597
        %1599 = vadd.xlane.f32.xlu0 %v1487
        %v1600 = vpop.xlane.xlu0 %1599
        %1601 = vadd.xlane.f32.xlu0 %v1488
        %v1602 = vpop.xlane.xlu0 %1601
        %1603 = vadd.xlane.f32.xlu0 %v1489
        %v1604 = vpop.xlane.xlu0 %1603
        %1605 = vadd.xlane.f32.xlu0 %v1490
        %v1606 = vpop.xlane.xlu0 %1605
        %1607 = vadd.xlane.f32.xlu0 %v1491
        %v1608 = vpop.xlane.xlu0 %1607
        %1609 = vadd.xlane.f32.xlu0 %v1492
        %v1610 = vpop.xlane.xlu0 %1609
        %1611 = vadd.xlane.f32.xlu0 %v1493
        %v1612 = vpop.xlane.xlu0 %1611
        %1613 = vadd.xlane.f32.xlu0 %v1494
        %v1614 = vpop.xlane.xlu0 %1613
        %1615 = vadd.xlane.f32.xlu0 %v1495
        %v1616 = vpop.xlane.xlu0 %1615
        %1617 = vadd.xlane.f32.xlu0 %v1496
        %v1618 = vpop.xlane.xlu0 %1617
        %1619 = vadd.xlane.f32.xlu0 %v1497
        %v1620 = vpop.xlane.xlu0 %1619
        %1621 = vadd.xlane.f32.xlu0 %v1498
        %v1622 = vpop.xlane.xlu0 %1621
        %1623 = vadd.xlane.f32.xlu0 %v1499
        %v1624 = vpop.xlane.xlu0 %1623
        %1625 = vadd.xlane.f32.xlu0 %v1500
        %v1626 = vpop.xlane.xlu0 %1625
        %1627 = vadd.xlane.f32.xlu0 %v1501
        %v1628 = vpop.xlane.xlu0 %1627
        %1629 = vadd.xlane.f32.xlu0 %v1502
        %v1630 = vpop.xlane.xlu0 %1629
        %v1631 = vmul.f32 %v1504, 0.0078125
        %v1632 = vmul.f32 %v1506, 0.0078125
        %v1633 = vmul.f32 %v1508, 0.0078125
        %v1634 = vmul.f32 %v1510, 0.0078125
        %v1635 = vmul.f32 %v1512, 0.0078125
        %v1636 = vmul.f32 %v1514, 0.0078125
        %v1637 = vmul.f32 %v1516, 0.0078125
        %v1638 = vmul.f32 %v1518, 0.0078125
        %v1639 = vmul.f32 %v1520, 0.0078125
        %v1640 = vmul.f32 %v1522, 0.0078125
        %v1641 = vmul.f32 %v1524, 0.0078125
        %v1642 = vmul.f32 %v1526, 0.0078125
        %v1643 = vmul.f32 %v1528, 0.0078125
        %v1644 = vmul.f32 %v1530, 0.0078125
        %v1645 = vmul.f32 %v1532, 0.0078125
        %v1646 = vmul.f32 %v1534, 0.0078125
        %v1647 = vmul.f32 %v1536, 0.0078125
        %v1648 = vmul.f32 %v1538, 0.0078125
        %v1649 = vmul.f32 %v1540, 0.0078125
        %v1650 = vmul.f32 %v1542, 0.0078125
        %v1651 = vmul.f32 %v1544, 0.0078125
        %v1652 = vmul.f32 %v1546, 0.0078125
        %v1653 = vmul.f32 %v1548, 0.0078125
        %v1654 = vmul.f32 %v1550, 0.0078125
        %v1655 = vmul.f32 %v1552, 0.0078125
        %v1656 = vmul.f32 %v1554, 0.0078125
        %v1657 = vmul.f32 %v1556, 0.0078125
        %v1658 = vmul.f32 %v1558, 0.0078125
        %v1659 = vmul.f32 %v1560, 0.0078125
        %v1660 = vmul.f32 %v1562, 0.0078125
        %v1661 = vmul.f32 %v1564, 0.0078125
        %v1662 = vmul.f32 %v1566, 0.0078125
        %v1663 = vmul.f32 %v1568, 0.0078125
        %v1664 = vmul.f32 %v1570, 0.0078125
        %v1665 = vmul.f32 %v1572, 0.0078125
        %v1666 = vmul.f32 %v1574, 0.0078125
        %v1667 = vmul.f32 %v1576, 0.0078125
        %v1668 = vmul.f32 %v1578, 0.0078125
        %v1669 = vmul.f32 %v1580, 0.0078125
        %v1670 = vmul.f32 %v1582, 0.0078125
        %v1671 = vmul.f32 %v1584, 0.0078125
        %v1672 = vmul.f32 %v1586, 0.0078125
        %v1673 = vmul.f32 %v1588, 0.0078125
        %v1674 = vmul.f32 %v1590, 0.0078125
        %v1675 = vmul.f32 %v1592, 0.0078125
        %v1676 = vmul.f32 %v1594, 0.0078125
        %v1677 = vmul.f32 %v1596, 0.0078125
        %v1678 = vmul.f32 %v1598, 0.0078125
        %v1679 = vmul.f32 %v1600, 0.0078125
        %v1680 = vmul.f32 %v1602, 0.0078125
        %v1681 = vmul.f32 %v1604, 0.0078125
        %v1682 = vmul.f32 %v1606, 0.0078125
        %v1683 = vmul.f32 %v1608, 0.0078125
        %v1684 = vmul.f32 %v1610, 0.0078125
        %v1685 = vmul.f32 %v1612, 0.0078125
        %v1686 = vmul.f32 %v1614, 0.0078125
        %v1687 = vmul.f32 %v1616, 0.0078125
        %v1688 = vmul.f32 %v1618, 0.0078125
        %v1689 = vmul.f32 %v1620, 0.0078125
        %v1690 = vmul.f32 %v1622, 0.0078125
        %v1691 = vmul.f32 %v1624, 0.0078125
        %v1692 = vmul.f32 %v1626, 0.0078125
        %v1693 = vmul.f32 %v1628, 0.0078125
        %v1694 = vmul.f32 %v1630, 0.0078125
        %v1695 = vsub.f32 %v1439, %v1631
        %v1696 = vsub.f32 %v1440, %v1632
        %v1697 = vsub.f32 %v1441, %v1633
        %v1698 = vsub.f32 %v1442, %v1634
        %v1699 = vsub.f32 %v1443, %v1635
        %v1700 = vsub.f32 %v1444, %v1636
        %v1701 = vsub.f32 %v1445, %v1637
        %v1702 = vsub.f32 %v1446, %v1638
        %v1703 = vsub.f32 %v1447, %v1639
        %v1704 = vsub.f32 %v1448, %v1640
        %v1705 = vsub.f32 %v1449, %v1641
        %v1706 = vsub.f32 %v1450, %v1642
        %v1707 = vsub.f32 %v1451, %v1643
        %v1708 = vsub.f32 %v1452, %v1644
        %v1709 = vsub.f32 %v1453, %v1645
        %v1710 = vsub.f32 %v1454, %v1646
        %v1711 = vsub.f32 %v1455, %v1647
        %v1712 = vsub.f32 %v1456, %v1648
        %v1713 = vsub.f32 %v1457, %v1649
        %v1714 = vsub.f32 %v1458, %v1650
        %v1715 = vsub.f32 %v1459, %v1651
        %v1716 = vsub.f32 %v1460, %v1652
        %v1717 = vsub.f32 %v1461, %v1653
        %v1718 = vsub.f32 %v1462, %v1654
        %v1719 = vsub.f32 %v1463, %v1655
        %v1720 = vsub.f32 %v1464, %v1656
        %v1721 = vsub.f32 %v1465, %v1657
        %v1722 = vsub.f32 %v1466, %v1658
        %v1723 = vsub.f32 %v1467, %v1659
        %v1724 = vsub.f32 %v1468, %v1660
        %v1725 = vsub.f32 %v1469, %v1661
        %v1726 = vsub.f32 %v1470, %v1662
        %v1727 = vsub.f32 %v1471, %v1663
        %v1728 = vsub.f32 %v1472, %v1664
        %v1729 = vsub.f32 %v1473, %v1665
        %v1730 = vsub.f32 %v1474, %v1666
        %v1731 = vsub.f32 %v1475, %v1667
        %v1732 = vsub.f32 %v1476, %v1668
        %v1733 = vsub.f32 %v1477, %v1669
        %v1734 = vsub.f32 %v1478, %v1670
        %v1735 = vsub.f32 %v1479, %v1671
        %v1736 = vsub.f32 %v1480, %v1672
        %v1737 = vsub.f32 %v1481, %v1673
        %v1738 = vsub.f32 %v1482, %v1674
        %v1739 = vsub.f32 %v1483, %v1675
        %v1740 = vsub.f32 %v1484, %v1676
        %v1741 = vsub.f32 %v1485, %v1677
        %v1742 = vsub.f32 %v1486, %v1678
        %v1743 = vsub.f32 %v1487, %v1679
        %v1744 = vsub.f32 %v1488, %v1680
        %v1745 = vsub.f32 %v1489, %v1681
        %v1746 = vsub.f32 %v1490, %v1682
        %v1747 = vsub.f32 %v1491, %v1683
        %v1748 = vsub.f32 %v1492, %v1684
        %v1749 = vsub.f32 %v1493, %v1685
        %v1750 = vsub.f32 %v1494, %v1686
        %v1751 = vsub.f32 %v1495, %v1687
        %v1752 = vsub.f32 %v1496, %v1688
        %v1753 = vsub.f32 %v1497, %v1689
        %v1754 = vsub.f32 %v1498, %v1690
        %v1755 = vsub.f32 %v1499, %v1691
        %v1756 = vsub.f32 %v1500, %v1692
        %v1757 = vsub.f32 %v1501, %v1693
        %v1758 = vsub.f32 %v1502, %v1694
        %v1759 = vmul.f32 %v1695, %v1695
        %v1760 = vmul.f32 %v1696, %v1696
        %v1761 = vmul.f32 %v1697, %v1697
        %v1762 = vmul.f32 %v1698, %v1698
        %v1763 = vmul.f32 %v1699, %v1699
        %v1764 = vmul.f32 %v1700, %v1700
        %v1765 = vmul.f32 %v1701, %v1701
        %v1766 = vmul.f32 %v1702, %v1702
        %v1767 = vmul.f32 %v1703, %v1703
        %v1768 = vmul.f32 %v1704, %v1704
        %v1769 = vmul.f32 %v1705, %v1705
        %v1770 = vmul.f32 %v1706, %v1706
        %v1771 = vmul.f32 %v1707, %v1707
        %v1772 = vmul.f32 %v1708, %v1708
        %v1773 = vmul.f32 %v1709, %v1709
        %v1774 = vmul.f32 %v1710, %v1710
        %v1775 = vmul.f32 %v1711, %v1711
        %v1776 = vmul.f32 %v1712, %v1712
        %v1777 = vmul.f32 %v1713, %v1713
        %v1778 = vmul.f32 %v1714, %v1714
        %v1779 = vmul.f32 %v1715, %v1715
        %v1780 = vmul.f32 %v1716, %v1716
        %v1781 = vmul.f32 %v1717, %v1717
        %v1782 = vmul.f32 %v1718, %v1718
        %v1783 = vmul.f32 %v1719, %v1719
        %v1784 = vmul.f32 %v1720, %v1720
        %v1785 = vmul.f32 %v1721, %v1721
        %v1786 = vmul.f32 %v1722, %v1722
        %v1787 = vmul.f32 %v1723, %v1723
        %v1788 = vmul.f32 %v1724, %v1724
        %v1789 = vmul.f32 %v1725, %v1725
        %v1790 = vmul.f32 %v1726, %v1726
        %v1791 = vmul.f32 %v1727, %v1727
        %v1792 = vmul.f32 %v1728, %v1728
        %v1793 = vmul.f32 %v1729, %v1729
        %v1794 = vmul.f32 %v1730, %v1730
        %v1795 = vmul.f32 %v1731, %v1731
        %v1796 = vmul.f32 %v1732, %v1732
        %v1797 = vmul.f32 %v1733, %v1733
        %v1798 = vmul.f32 %v1734, %v1734
        %v1799 = vmul.f32 %v1735, %v1735
        %v1800 = vmul.f32 %v1736, %v1736
        %v1801 = vmul.f32 %v1737, %v1737
        %v1802 = vmul.f32 %v1738, %v1738
        %v1803 = vmul.f32 %v1739, %v1739
        %v1804 = vmul.f32 %v1740, %v1740
        %v1805 = vmul.f32 %v1741, %v1741
        %v1806 = vmul.f32 %v1742, %v1742
        %v1807 = vmul.f32 %v1743, %v1743
        %v1808 = vmul.f32 %v1744, %v1744
        %v1809 = vmul.f32 %v1745, %v1745
        %v1810 = vmul.f32 %v1746, %v1746
        %v1811 = vmul.f32 %v1747, %v1747
        %v1812 = vmul.f32 %v1748, %v1748
        %v1813 = vmul.f32 %v1749, %v1749
        %v1814 = vmul.f32 %v1750, %v1750
        %v1815 = vmul.f32 %v1751, %v1751
        %v1816 = vmul.f32 %v1752, %v1752
        %v1817 = vmul.f32 %v1753, %v1753
        %v1818 = vmul.f32 %v1754, %v1754
        %v1819 = vmul.f32 %v1755, %v1755
        %v1820 = vmul.f32 %v1756, %v1756
        %v1821 = vmul.f32 %v1757, %v1757
        %v1822 = vmul.f32 %v1758, %v1758
        %1823 = vadd.xlane.f32.xlu0 %v1759
        %v1824 = vpop.xlane.xlu0 %1823
        %1825 = vadd.xlane.f32.xlu0 %v1760
        %v1826 = vpop.xlane.xlu0 %1825
        %1827 = vadd.xlane.f32.xlu0 %v1761
        %v1828 = vpop.xlane.xlu0 %1827
        %1829 = vadd.xlane.f32.xlu0 %v1762
        %v1830 = vpop.xlane.xlu0 %1829
        %1831 = vadd.xlane.f32.xlu0 %v1763
        %v1832 = vpop.xlane.xlu0 %1831
        %1833 = vadd.xlane.f32.xlu0 %v1764
        %v1834 = vpop.xlane.xlu0 %1833
        %1835 = vadd.xlane.f32.xlu0 %v1765
        %v1836 = vpop.xlane.xlu0 %1835
        %1837 = vadd.xlane.f32.xlu0 %v1766
        %v1838 = vpop.xlane.xlu0 %1837
        %1839 = vadd.xlane.f32.xlu0 %v1767
        %v1840 = vpop.xlane.xlu0 %1839
        %1841 = vadd.xlane.f32.xlu0 %v1768
        %v1842 = vpop.xlane.xlu0 %1841
        %1843 = vadd.xlane.f32.xlu0 %v1769
        %v1844 = vpop.xlane.xlu0 %1843
        %1845 = vadd.xlane.f32.xlu0 %v1770
        %v1846 = vpop.xlane.xlu0 %1845
        %1847 = vadd.xlane.f32.xlu0 %v1771
        %v1848 = vpop.xlane.xlu0 %1847
        %1849 = vadd.xlane.f32.xlu0 %v1772
        %v1850 = vpop.xlane.xlu0 %1849
        %1851 = vadd.xlane.f32.xlu0 %v1773
        %v1852 = vpop.xlane.xlu0 %1851
        %1853 = vadd.xlane.f32.xlu0 %v1774
        %v1854 = vpop.xlane.xlu0 %1853
        %1855 = vadd.xlane.f32.xlu0 %v1775
        %v1856 = vpop.xlane.xlu0 %1855
        %1857 = vadd.xlane.f32.xlu0 %v1776
        %v1858 = vpop.xlane.xlu0 %1857
        %1859 = vadd.xlane.f32.xlu0 %v1777
        %v1860 = vpop.xlane.xlu0 %1859
        %1861 = vadd.xlane.f32.xlu0 %v1778
        %v1862 = vpop.xlane.xlu0 %1861
        %1863 = vadd.xlane.f32.xlu0 %v1779
        %v1864 = vpop.xlane.xlu0 %1863
        %1865 = vadd.xlane.f32.xlu0 %v1780
        %v1866 = vpop.xlane.xlu0 %1865
        %1867 = vadd.xlane.f32.xlu0 %v1781
        %v1868 = vpop.xlane.xlu0 %1867
        %1869 = vadd.xlane.f32.xlu0 %v1782
        %v1870 = vpop.xlane.xlu0 %1869
        %1871 = vadd.xlane.f32.xlu0 %v1783
        %v1872 = vpop.xlane.xlu0 %1871
        %1873 = vadd.xlane.f32.xlu0 %v1784
        %v1874 = vpop.xlane.xlu0 %1873
        %1875 = vadd.xlane.f32.xlu0 %v1785
        %v1876 = vpop.xlane.xlu0 %1875
        %1877 = vadd.xlane.f32.xlu0 %v1786
        %v1878 = vpop.xlane.xlu0 %1877
        %1879 = vadd.xlane.f32.xlu0 %v1787
        %v1880 = vpop.xlane.xlu0 %1879
        %1881 = vadd.xlane.f32.xlu0 %v1788
        %v1882 = vpop.xlane.xlu0 %1881
        %1883 = vadd.xlane.f32.xlu0 %v1789
        %v1884 = vpop.xlane.xlu0 %1883
        %1885 = vadd.xlane.f32.xlu0 %v1790
        %v1886 = vpop.xlane.xlu0 %1885
        %1887 = vadd.xlane.f32.xlu0 %v1791
        %v1888 = vpop.xlane.xlu0 %1887
        %1889 = vadd.xlane.f32.xlu0 %v1792
        %v1890 = vpop.xlane.xlu0 %1889
        %1891 = vadd.xlane.f32.xlu0 %v1793
        %v1892 = vpop.xlane.xlu0 %1891
        %1893 = vadd.xlane.f32.xlu0 %v1794
        %v1894 = vpop.xlane.xlu0 %1893
        %1895 = vadd.xlane.f32.xlu0 %v1795
        %v1896 = vpop.xlane.xlu0 %1895
        %1897 = vadd.xlane.f32.xlu0 %v1796
        %v1898 = vpop.xlane.xlu0 %1897
        %1899 = vadd.xlane.f32.xlu0 %v1797
        %v1900 = vpop.xlane.xlu0 %1899
        %1901 = vadd.xlane.f32.xlu0 %v1798
        %v1902 = vpop.xlane.xlu0 %1901
        %1903 = vadd.xlane.f32.xlu0 %v1799
        %v1904 = vpop.xlane.xlu0 %1903
        %1905 = vadd.xlane.f32.xlu0 %v1800
        %v1906 = vpop.xlane.xlu0 %1905
        %1907 = vadd.xlane.f32.xlu0 %v1801
        %v1908 = vpop.xlane.xlu0 %1907
        %1909 = vadd.xlane.f32.xlu0 %v1802
        %v1910 = vpop.xlane.xlu0 %1909
        %1911 = vadd.xlane.f32.xlu0 %v1803
        %v1912 = vpop.xlane.xlu0 %1911
        %1913 = vadd.xlane.f32.xlu0 %v1804
        %v1914 = vpop.xlane.xlu0 %1913
        %1915 = vadd.xlane.f32.xlu0 %v1805
        %v1916 = vpop.xlane.xlu0 %1915
        %1917 = vadd.xlane.f32.xlu0 %v1806
        %v1918 = vpop.xlane.xlu0 %1917
        %1919 = vadd.xlane.f32.xlu0 %v1807
        %v1920 = vpop.xlane.xlu0 %1919
        %1921 = vadd.xlane.f32.xlu0 %v1808
        %v1922 = vpop.xlane.xlu0 %1921
        %1923 = vadd.xlane.f32.xlu0 %v1809
        %v1924 = vpop.xlane.xlu0 %1923
        %1925 = vadd.xlane.f32.xlu0 %v1810
        %v1926 = vpop.xlane.xlu0 %1925
        %1927 = vadd.xlane.f32.xlu0 %v1811
        %v1928 = vpop.xlane.xlu0 %1927
        %1929 = vadd.xlane.f32.xlu0 %v1812
        %v1930 = vpop.xlane.xlu0 %1929
        %1931 = vadd.xlane.f32.xlu0 %v1813
        %v1932 = vpop.xlane.xlu0 %1931
        %1933 = vadd.xlane.f32.xlu0 %v1814
        %v1934 = vpop.xlane.xlu0 %1933
        %1935 = vadd.xlane.f32.xlu0 %v1815
        %v1936 = vpop.xlane.xlu0 %1935
        %1937 = vadd.xlane.f32.xlu0 %v1816
        %v1938 = vpop.xlane.xlu0 %1937
        %1939 = vadd.xlane.f32.xlu0 %v1817
        %v1940 = vpop.xlane.xlu0 %1939
        %1941 = vadd.xlane.f32.xlu0 %v1818
        %v1942 = vpop.xlane.xlu0 %1941
        %1943 = vadd.xlane.f32.xlu0 %v1819
        %v1944 = vpop.xlane.xlu0 %1943
        %1945 = vadd.xlane.f32.xlu0 %v1820
        %v1946 = vpop.xlane.xlu0 %1945
        %1947 = vadd.xlane.f32.xlu0 %v1821
        %v1948 = vpop.xlane.xlu0 %1947
        %1949 = vadd.xlane.f32.xlu0 %v1822
        %v1950 = vpop.xlane.xlu0 %1949
        %v1951 = vmul.f32 %v1824, 0.007874016
        %v1952 = vmul.f32 %v1826, 0.007874016
        %v1953 = vmul.f32 %v1828, 0.007874016
        %v1954 = vmul.f32 %v1830, 0.007874016
        %v1955 = vmul.f32 %v1832, 0.007874016
        %v1956 = vmul.f32 %v1834, 0.007874016
        %v1957 = vmul.f32 %v1836, 0.007874016
        %v1958 = vmul.f32 %v1838, 0.007874016
        %v1959 = vmul.f32 %v1840, 0.007874016
        %v1960 = vmul.f32 %v1842, 0.007874016
        %v1961 = vmul.f32 %v1844, 0.007874016
        %v1962 = vmul.f32 %v1846, 0.007874016
        %v1963 = vmul.f32 %v1848, 0.007874016
        %v1964 = vmul.f32 %v1850, 0.007874016
        %v1965 = vmul.f32 %v1852, 0.007874016
        %v1966 = vmul.f32 %v1854, 0.007874016
        %v1967 = vmul.f32 %v1856, 0.007874016
        %v1968 = vmul.f32 %v1858, 0.007874016
        %v1969 = vmul.f32 %v1860, 0.007874016
        %v1970 = vmul.f32 %v1862, 0.007874016
        %v1971 = vmul.f32 %v1864, 0.007874016
        %v1972 = vmul.f32 %v1866, 0.007874016
        %v1973 = vmul.f32 %v1868, 0.007874016
        %v1974 = vmul.f32 %v1870, 0.007874016
        %v1975 = vmul.f32 %v1872, 0.007874016
        %v1976 = vmul.f32 %v1874, 0.007874016
        %v1977 = vmul.f32 %v1876, 0.007874016
        %v1978 = vmul.f32 %v1878, 0.007874016
        %v1979 = vmul.f32 %v1880, 0.007874016
        %v1980 = vmul.f32 %v1882, 0.007874016
        %v1981 = vmul.f32 %v1884, 0.007874016
        %v1982 = vmul.f32 %v1886, 0.007874016
        %v1983 = vmul.f32 %v1888, 0.007874016
        %v1984 = vmul.f32 %v1890, 0.007874016
        %v1985 = vmul.f32 %v1892, 0.007874016
        %v1986 = vmul.f32 %v1894, 0.007874016
        %v1987 = vmul.f32 %v1896, 0.007874016
        %v1988 = vmul.f32 %v1898, 0.007874016
        %v1989 = vmul.f32 %v1900, 0.007874016
        %v1990 = vmul.f32 %v1902, 0.007874016
        %v1991 = vmul.f32 %v1904, 0.007874016
        %v1992 = vmul.f32 %v1906, 0.007874016
        %v1993 = vmul.f32 %v1908, 0.007874016
        %v1994 = vmul.f32 %v1910, 0.007874016
        %v1995 = vmul.f32 %v1912, 0.007874016
        %v1996 = vmul.f32 %v1914, 0.007874016
        %v1997 = vmul.f32 %v1916, 0.007874016
        %v1998 = vmul.f32 %v1918, 0.007874016
        %v1999 = vmul.f32 %v1920, 0.007874016
        %v2000 = vmul.f32 %v1922, 0.007874016
        %v2001 = vmul.f32 %v1924, 0.007874016
        %v2002 = vmul.f32 %v1926, 0.007874016
        %v2003 = vmul.f32 %v1928, 0.007874016
        %v2004 = vmul.f32 %v1930, 0.007874016
        %v2005 = vmul.f32 %v1932, 0.007874016
        %v2006 = vmul.f32 %v1934, 0.007874016
        %v2007 = vmul.f32 %v1936, 0.007874016
        %v2008 = vmul.f32 %v1938, 0.007874016
        %v2009 = vmul.f32 %v1940, 0.007874016
        %v2010 = vmul.f32 %v1942, 0.007874016
        %v2011 = vmul.f32 %v1944, 0.007874016
        %v2012 = vmul.f32 %v1946, 0.007874016
        %v2013 = vmul.f32 %v1948, 0.007874016
        %v2014 = vmul.f32 %v1950, 0.007874016
        %v2015 = vmax.f32 %v1951, 0.0
        %v2016 = vmax.f32 %v1952, 0.0
        %v2017 = vmax.f32 %v1953, 0.0
        %v2018 = vmax.f32 %v1954, 0.0
        %v2019 = vmax.f32 %v1955, 0.0
        %v2020 = vmax.f32 %v1956, 0.0
        %v2021 = vmax.f32 %v1957, 0.0
        %v2022 = vmax.f32 %v1958, 0.0
        %v2023 = vmax.f32 %v1959, 0.0
        %v2024 = vmax.f32 %v1960, 0.0
        %v2025 = vmax.f32 %v1961, 0.0
        %v2026 = vmax.f32 %v1962, 0.0
        %v2027 = vmax.f32 %v1963, 0.0
        %v2028 = vmax.f32 %v1964, 0.0
        %v2029 = vmax.f32 %v1965, 0.0
        %v2030 = vmax.f32 %v1966, 0.0
        %v2031 = vmax.f32 %v1967, 0.0
        %v2032 = vmax.f32 %v1968, 0.0
        %v2033 = vmax.f32 %v1969, 0.0
        %v2034 = vmax.f32 %v1970, 0.0
        %v2035 = vmax.f32 %v1971, 0.0
        %v2036 = vmax.f32 %v1972, 0.0
        %v2037 = vmax.f32 %v1973, 0.0
        %v2038 = vmax.f32 %v1974, 0.0
        %v2039 = vmax.f32 %v1975, 0.0
        %v2040 = vmax.f32 %v1976, 0.0
        %v2041 = vmax.f32 %v1977, 0.0
        %v2042 = vmax.f32 %v1978, 0.0
        %v2043 = vmax.f32 %v1979, 0.0
        %v2044 = vmax.f32 %v1980, 0.0
        %v2045 = vmax.f32 %v1981, 0.0
        %v2046 = vmax.f32 %v1982, 0.0
        %v2047 = vmax.f32 %v1983, 0.0
        %v2048 = vmax.f32 %v1984, 0.0
        %v2049 = vmax.f32 %v1985, 0.0
        %v2050 = vmax.f32 %v1986, 0.0
        %v2051 = vmax.f32 %v1987, 0.0
        %v2052 = vmax.f32 %v1988, 0.0
        %v2053 = vmax.f32 %v1989, 0.0
        %v2054 = vmax.f32 %v1990, 0.0
        %v2055 = vmax.f32 %v1991, 0.0
        %v2056 = vmax.f32 %v1992, 0.0
        %v2057 = vmax.f32 %v1993, 0.0
        %v2058 = vmax.f32 %v1994, 0.0
        %v2059 = vmax.f32 %v1995, 0.0
        %v2060 = vmax.f32 %v1996, 0.0
        %v2061 = vmax.f32 %v1997, 0.0
        %v2062 = vmax.f32 %v1998, 0.0
        %v2063 = vmax.f32 %v1999, 0.0
        %v2064 = vmax.f32 %v2000, 0.0
        %v2065 = vmax.f32 %v2001, 0.0
        %v2066 = vmax.f32 %v2002, 0.0
        %v2067 = vmax.f32 %v2003, 0.0
        %v2068 = vmax.f32 %v2004, 0.0
        %v2069 = vmax.f32 %v2005, 0.0
        %v2070 = vmax.f32 %v2006, 0.0
        %v2071 = vmax.f32 %v2007, 0.0
        %v2072 = vmax.f32 %v2008, 0.0
        %v2073 = vmax.f32 %v2009, 0.0
        %v2074 = vmax.f32 %v2010, 0.0
        %v2075 = vmax.f32 %v2011, 0.0
        %v2076 = vmax.f32 %v2012, 0.0
        %v2077 = vmax.f32 %v2013, 0.0
        %v2078 = vmax.f32 %v2014, 0.0
        %v2079 = vrsqrt.pop %v2015
        %v2080 = vrsqrt.pop %v2016
        %v2081 = vrsqrt.pop %v2017
        %v2082 = vrsqrt.pop %v2018
        %v2083 = vrsqrt.pop %v2019
        %v2084 = vrsqrt.pop %v2020
        %v2085 = vrsqrt.pop %v2021
        %v2086 = vrsqrt.pop %v2022
        %v2087 = vrsqrt.pop %v2023
        %v2088 = vrsqrt.pop %v2024
        %v2089 = vrsqrt.pop %v2025
        %v2090 = vrsqrt.pop %v2026
        %v2091 = vrsqrt.pop %v2027
        %v2092 = vrsqrt.pop %v2028
        %v2093 = vrsqrt.pop %v2029
        %v2094 = vrsqrt.pop %v2030
        %v2095 = vrsqrt.pop %v2031
        %v2096 = vrsqrt.pop %v2032
        %v2097 = vrsqrt.pop %v2033
        %v2098 = vrsqrt.pop %v2034
        %v2099 = vrsqrt.pop %v2035
        %v2100 = vrsqrt.pop %v2036
        %v2101 = vrsqrt.pop %v2037
        %v2102 = vrsqrt.pop %v2038
        %v2103 = vrsqrt.pop %v2039
        %v2104 = vrsqrt.pop %v2040
        %v2105 = vrsqrt.pop %v2041
        %v2106 = vrsqrt.pop %v2042
        %v2107 = vrsqrt.pop %v2043
        %v2108 = vrsqrt.pop %v2044
        %v2109 = vrsqrt.pop %v2045
        %v2110 = vrsqrt.pop %v2046
        %v2111 = vrsqrt.pop %v2047
        %v2112 = vrsqrt.pop %v2048
        %v2113 = vrsqrt.pop %v2049
        %v2114 = vrsqrt.pop %v2050
        %v2115 = vrsqrt.pop %v2051
        %v2116 = vrsqrt.pop %v2052
        %v2117 = vrsqrt.pop %v2053
        %v2118 = vrsqrt.pop %v2054
        %v2119 = vrsqrt.pop %v2055
        %v2120 = vrsqrt.pop %v2056
        %v2121 = vrsqrt.pop %v2057
        %v2122 = vrsqrt.pop %v2058
        %v2123 = vrsqrt.pop %v2059
        %v2124 = vrsqrt.pop %v2060
        %v2125 = vrsqrt.pop %v2061
        %v2126 = vrsqrt.pop %v2062
        %v2127 = vrsqrt.pop %v2063
        %v2128 = vrsqrt.pop %v2064
        %v2129 = vrsqrt.pop %v2065
        %v2130 = vrsqrt.pop %v2066
        %v2131 = vrsqrt.pop %v2067
        %v2132 = vrsqrt.pop %v2068
        %v2133 = vrsqrt.pop %v2069
        %v2134 = vrsqrt.pop %v2070
        %v2135 = vrsqrt.pop %v2071
        %v2136 = vrsqrt.pop %v2072
        %v2137 = vrsqrt.pop %v2073
        %v2138 = vrsqrt.pop %v2074
        %v2139 = vrsqrt.pop %v2075
        %v2140 = vrsqrt.pop %v2076
        %v2141 = vrsqrt.pop %v2077
        %v2142 = vrsqrt.pop %v2078
        %v2144 = vlaneseq
        %v2145 = vshrl.u32 %v2144, 7
        %v2146 = vsub.s32 0, %v2145
        %v2147 = vrot.slane %v1437, %v2146
        %v2149 = vmul.f32 %v2079, %v2147
        %v2150 = vmul.f32 %v2080, %v2147
        %v2151 = vmul.f32 %v2081, %v2147
        %v2152 = vmul.f32 %v2082, %v2147
        %v2153 = vmul.f32 %v2083, %v2147
        %v2154 = vmul.f32 %v2084, %v2147
        %v2155 = vmul.f32 %v2085, %v2147
        %v2156 = vmul.f32 %v2086, %v2147
        %v2157 = vmul.f32 %v2087, %v2147
        %v2158 = vmul.f32 %v2088, %v2147
        %v2159 = vmul.f32 %v2089, %v2147
        %v2160 = vmul.f32 %v2090, %v2147
        %v2161 = vmul.f32 %v2091, %v2147
        %v2162 = vmul.f32 %v2092, %v2147
        %v2163 = vmul.f32 %v2093, %v2147
        %v2164 = vmul.f32 %v2094, %v2147
        %v2165 = vmul.f32 %v2095, %v2147
        %v2166 = vmul.f32 %v2096, %v2147
        %v2167 = vmul.f32 %v2097, %v2147
        %v2168 = vmul.f32 %v2098, %v2147
        %v2169 = vmul.f32 %v2099, %v2147
        %v2170 = vmul.f32 %v2100, %v2147
        %v2171 = vmul.f32 %v2101, %v2147
        %v2172 = vmul.f32 %v2102, %v2147
        %v2173 = vmul.f32 %v2103, %v2147
        %v2174 = vmul.f32 %v2104, %v2147
        %v2175 = vmul.f32 %v2105, %v2147
        %v2176 = vmul.f32 %v2106, %v2147
        %v2177 = vmul.f32 %v2107, %v2147
        %v2178 = vmul.f32 %v2108, %v2147
        %v2179 = vmul.f32 %v2109, %v2147
        %v2180 = vmul.f32 %v2110, %v2147
        %v2181 = vmul.f32 %v2111, %v2147
        %v2182 = vmul.f32 %v2112, %v2147
        %v2183 = vmul.f32 %v2113, %v2147
        %v2184 = vmul.f32 %v2114, %v2147
        %v2185 = vmul.f32 %v2115, %v2147
        %v2186 = vmul.f32 %v2116, %v2147
        %v2187 = vmul.f32 %v2117, %v2147
        %v2188 = vmul.f32 %v2118, %v2147
        %v2189 = vmul.f32 %v2119, %v2147
        %v2190 = vmul.f32 %v2120, %v2147
        %v2191 = vmul.f32 %v2121, %v2147
        %v2192 = vmul.f32 %v2122, %v2147
        %v2193 = vmul.f32 %v2123, %v2147
        %v2194 = vmul.f32 %v2124, %v2147
        %v2195 = vmul.f32 %v2125, %v2147
        %v2196 = vmul.f32 %v2126, %v2147
        %v2197 = vmul.f32 %v2127, %v2147
        %v2198 = vmul.f32 %v2128, %v2147
        %v2199 = vmul.f32 %v2129, %v2147
        %v2200 = vmul.f32 %v2130, %v2147
        %v2201 = vmul.f32 %v2131, %v2147
        %v2202 = vmul.f32 %v2132, %v2147
        %v2203 = vmul.f32 %v2133, %v2147
        %v2204 = vmul.f32 %v2134, %v2147
        %v2205 = vmul.f32 %v2135, %v2147
        %v2206 = vmul.f32 %v2136, %v2147
        %v2207 = vmul.f32 %v2137, %v2147
        %v2208 = vmul.f32 %v2138, %v2147
        %v2209 = vmul.f32 %v2139, %v2147
        %v2210 = vmul.f32 %v2140, %v2147
        %v2211 = vmul.f32 %v2141, %v2147
        %v2212 = vmul.f32 %v2142, %v2147
        %v2213 = vmul.f32 %v1695, %v2149
        %v2214 = vmul.f32 %v1696, %v2150
        %v2215 = vmul.f32 %v1697, %v2151
        %v2216 = vmul.f32 %v1698, %v2152
        %v2217 = vmul.f32 %v1699, %v2153
        %v2218 = vmul.f32 %v1700, %v2154
        %v2219 = vmul.f32 %v1701, %v2155
        %v2220 = vmul.f32 %v1702, %v2156
        %v2221 = vmul.f32 %v1703, %v2157
        %v2222 = vmul.f32 %v1704, %v2158
        %v2223 = vmul.f32 %v1705, %v2159
        %v2224 = vmul.f32 %v1706, %v2160
        %v2225 = vmul.f32 %v1707, %v2161
        %v2226 = vmul.f32 %v1708, %v2162
        %v2227 = vmul.f32 %v1709, %v2163
        %v2228 = vmul.f32 %v1710, %v2164
        %v2229 = vmul.f32 %v1711, %v2165
        %v2230 = vmul.f32 %v1712, %v2166
        %v2231 = vmul.f32 %v1713, %v2167
        %v2232 = vmul.f32 %v1714, %v2168
        %v2233 = vmul.f32 %v1715, %v2169
        %v2234 = vmul.f32 %v1716, %v2170
        %v2235 = vmul.f32 %v1717, %v2171
        %v2236 = vmul.f32 %v1718, %v2172
        %v2237 = vmul.f32 %v1719, %v2173
        %v2238 = vmul.f32 %v1720, %v2174
        %v2239 = vmul.f32 %v1721, %v2175
        %v2240 = vmul.f32 %v1722, %v2176
        %v2241 = vmul.f32 %v1723, %v2177
        %v2242 = vmul.f32 %v1724, %v2178
        %v2243 = vmul.f32 %v1725, %v2179
        %v2244 = vmul.f32 %v1726, %v2180
        %v2245 = vmul.f32 %v1727, %v2181
        %v2246 = vmul.f32 %v1728, %v2182
        %v2247 = vmul.f32 %v1729, %v2183
        %v2248 = vmul.f32 %v1730, %v2184
        %v2249 = vmul.f32 %v1731, %v2185
        %v2250 = vmul.f32 %v1732, %v2186
        %v2251 = vmul.f32 %v1733, %v2187
        %v2252 = vmul.f32 %v1734, %v2188
        %v2253 = vmul.f32 %v1735, %v2189
        %v2254 = vmul.f32 %v1736, %v2190
        %v2255 = vmul.f32 %v1737, %v2191
        %v2256 = vmul.f32 %v1738, %v2192
        %v2257 = vmul.f32 %v1739, %v2193
        %v2258 = vmul.f32 %v1740, %v2194
        %v2259 = vmul.f32 %v1741, %v2195
        %v2260 = vmul.f32 %v1742, %v2196
        %v2261 = vmul.f32 %v1743, %v2197
        %v2262 = vmul.f32 %v1744, %v2198
        %v2263 = vmul.f32 %v1745, %v2199
        %v2264 = vmul.f32 %v1746, %v2200
        %v2265 = vmul.f32 %v1747, %v2201
        %v2266 = vmul.f32 %v1748, %v2202
        %v2267 = vmul.f32 %v1749, %v2203
        %v2268 = vmul.f32 %v1750, %v2204
        %v2269 = vmul.f32 %v1751, %v2205
        %v2270 = vmul.f32 %v1752, %v2206
        %v2271 = vmul.f32 %v1753, %v2207
        %v2272 = vmul.f32 %v1754, %v2208
        %v2273 = vmul.f32 %v1755, %v2209
        %v2274 = vmul.f32 %v1756, %v2210
        %v2275 = vmul.f32 %v1757, %v2211
        %v2276 = vmul.f32 %v1758, %v2212
        %v2278 = vlaneseq
        %v2279 = vshrl.u32 %v2278, 7
        %v2280 = vsub.s32 0, %v2279
        %v2281 = vrot.slane %v1438, %v2280
        %v2283 = vadd.f32 %v2213, %v2281
        %v2284 = vadd.f32 %v2214, %v2281
        %v2285 = vadd.f32 %v2215, %v2281
        %v2286 = vadd.f32 %v2216, %v2281
        %v2287 = vadd.f32 %v2217, %v2281
        %v2288 = vadd.f32 %v2218, %v2281
        %v2289 = vadd.f32 %v2219, %v2281
        %v2290 = vadd.f32 %v2220, %v2281
        %v2291 = vadd.f32 %v2221, %v2281
        %v2292 = vadd.f32 %v2222, %v2281
        %v2293 = vadd.f32 %v2223, %v2281
        %v2294 = vadd.f32 %v2224, %v2281
        %v2295 = vadd.f32 %v2225, %v2281
        %v2296 = vadd.f32 %v2226, %v2281
        %v2297 = vadd.f32 %v2227, %v2281
        %v2298 = vadd.f32 %v2228, %v2281
        %v2299 = vadd.f32 %v2229, %v2281
        %v2300 = vadd.f32 %v2230, %v2281
        %v2301 = vadd.f32 %v2231, %v2281
        %v2302 = vadd.f32 %v2232, %v2281
        %v2303 = vadd.f32 %v2233, %v2281
        %v2304 = vadd.f32 %v2234, %v2281
        %v2305 = vadd.f32 %v2235, %v2281
        %v2306 = vadd.f32 %v2236, %v2281
        %v2307 = vadd.f32 %v2237, %v2281
        %v2308 = vadd.f32 %v2238, %v2281
        %v2309 = vadd.f32 %v2239, %v2281
        %v2310 = vadd.f32 %v2240, %v2281
        %v2311 = vadd.f32 %v2241, %v2281
        %v2312 = vadd.f32 %v2242, %v2281
        %v2313 = vadd.f32 %v2243, %v2281
        %v2314 = vadd.f32 %v2244, %v2281
        %v2315 = vadd.f32 %v2245, %v2281
        %v2316 = vadd.f32 %v2246, %v2281
        %v2317 = vadd.f32 %v2247, %v2281
        %v2318 = vadd.f32 %v2248, %v2281
        %v2319 = vadd.f32 %v2249, %v2281
        %v2320 = vadd.f32 %v2250, %v2281
        %v2321 = vadd.f32 %v2251, %v2281
        %v2322 = vadd.f32 %v2252, %v2281
        %v2323 = vadd.f32 %v2253, %v2281
        %v2324 = vadd.f32 %v2254, %v2281
        %v2325 = vadd.f32 %v2255, %v2281
        %v2326 = vadd.f32 %v2256, %v2281
        %v2327 = vadd.f32 %v2257, %v2281
        %v2328 = vadd.f32 %v2258, %v2281
        %v2329 = vadd.f32 %v2259, %v2281
        %v2330 = vadd.f32 %v2260, %v2281
        %v2331 = vadd.f32 %v2261, %v2281
        %v2332 = vadd.f32 %v2262, %v2281
        %v2333 = vadd.f32 %v2263, %v2281
        %v2334 = vadd.f32 %v2264, %v2281
        %v2335 = vadd.f32 %v2265, %v2281
        %v2336 = vadd.f32 %v2266, %v2281
        %v2337 = vadd.f32 %v2267, %v2281
        %v2338 = vadd.f32 %v2268, %v2281
        %v2339 = vadd.f32 %v2269, %v2281
        %v2340 = vadd.f32 %v2270, %v2281
        %v2341 = vadd.f32 %v2271, %v2281
        %v2342 = vadd.f32 %v2272, %v2281
        %v2343 = vadd.f32 %v2273, %v2281
        %v2344 = vadd.f32 %v2274, %v2281
        %v2345 = vadd.f32 %v2275, %v2281
        %v2346 = vadd.f32 %v2276, %v2281
        %2347 = vst [vmem:[%s325] sm:$0xff] %v2283
        %2348 = vst [vmem:[%s325 + $0x8] sm:$0xff] %v2284
        %2349 = vst [vmem:[%s325 + $0x10] sm:$0xff] %v2285
        %2350 = vst [vmem:[%s325 + $0x18] sm:$0xff] %v2286
        %2351 = vst [vmem:[%s325 + $0x20] sm:$0xff] %v2287
        %2352 = vst [vmem:[%s325 + $0x28] sm:$0xff] %v2288
        %2353 = vst [vmem:[%s325 + $0x30] sm:$0xff] %v2289
        %2354 = vst [vmem:[%s325 + $0x38] sm:$0xff] %v2290
        %2355 = vst [vmem:[%s325 + $0x40] sm:$0xff] %v2291
        %2356 = vst [vmem:[%s325 + $0x48] sm:$0xff] %v2292
        %2357 = vst [vmem:[%s325 + $0x50] sm:$0xff] %v2293
        %2358 = vst [vmem:[%s325 + $0x58] sm:$0xff] %v2294
        %2359 = vst [vmem:[%s325 + $0x60] sm:$0xff] %v2295
        %2360 = vst [vmem:[%s325 + $0x68] sm:$0xff] %v2296
        %2361 = vst [vmem:[%s325 + $0x70] sm:$0xff] %v2297
        %2362 = vst [vmem:[%s325 + $0x78] sm:$0xff] %v2298
        %2363 = vst [vmem:[%s325 + $0x80] sm:$0xff] %v2299
        %2364 = vst [vmem:[%s325 + $0x88] sm:$0xff] %v2300
        %2365 = vst [vmem:[%s325 + $0x90] sm:$0xff] %v2301
        %2366 = vst [vmem:[%s325 + $0x98] sm:$0xff] %v2302
        %2367 = vst [vmem:[%s325 + $0xa0] sm:$0xff] %v2303
        %2368 = vst [vmem:[%s325 + $0xa8] sm:$0xff] %v2304
        %2369 = vst [vmem:[%s325 + $0xb0] sm:$0xff] %v2305
        %2370 = vst [vmem:[%s325 + $0xb8] sm:$0xff] %v2306
        %2371 = vst [vmem:[%s325 + $0xc0] sm:$0xff] %v2307
        %2372 = vst [vmem:[%s325 + $0xc8] sm:$0xff] %v2308
        %2373 = vst [vmem:[%s325 + $0xd0] sm:$0xff] %v2309
        %2374 = vst [vmem:[%s325 + $0xd8] sm:$0xff] %v2310
        %2375 = vst [vmem:[%s325 + $0xe0] sm:$0xff] %v2311
        %2376 = vst [vmem:[%s325 + $0xe8] sm:$0xff] %v2312
        %2377 = vst [vmem:[%s325 + $0xf0] sm:$0xff] %v2313
        %2378 = vst [vmem:[%s325 + $0xf8] sm:$0xff] %v2314
        %2379 = vst [vmem:[%s325 + $0x100] sm:$0xff] %v2315
        %2380 = vst [vmem:[%s325 + $0x108] sm:$0xff] %v2316
        %2381 = vst [vmem:[%s325 + $0x110] sm:$0xff] %v2317
        %2382 = vst [vmem:[%s325 + $0x118] sm:$0xff] %v2318
        %2383 = vst [vmem:[%s325 + $0x120] sm:$0xff] %v2319
        %2384 = vst [vmem:[%s325 + $0x128] sm:$0xff] %v2320
        %2385 = vst [vmem:[%s325 + $0x130] sm:$0xff] %v2321
        %2386 = vst [vmem:[%s325 + $0x138] sm:$0xff] %v2322
        %2387 = vst [vmem:[%s325 + $0x140] sm:$0xff] %v2323
        %2388 = vst [vmem:[%s325 + $0x148] sm:$0xff] %v2324
        %2389 = vst [vmem:[%s325 + $0x150] sm:$0xff] %v2325
        %2390 = vst [vmem:[%s325 + $0x158] sm:$0xff] %v2326
        %2391 = vst [vmem:[%s325 + $0x160] sm:$0xff] %v2327
        %2392 = vst [vmem:[%s325 + $0x168] sm:$0xff] %v2328
        %2393 = vst [vmem:[%s325 + $0x170] sm:$0xff] %v2329
        %2394 = vst [vmem:[%s325 + $0x178] sm:$0xff] %v2330
        %2395 = vst [vmem:[%s325 + $0x180] sm:$0xff] %v2331
        %2396 = vst [vmem:[%s325 + $0x188] sm:$0xff] %v2332
        %2397 = vst [vmem:[%s325 + $0x190] sm:$0xff] %v2333
        %2398 = vst [vmem:[%s325 + $0x198] sm:$0xff] %v2334
        %2399 = vst [vmem:[%s325 + $0x1a0] sm:$0xff] %v2335
        %2400 = vst [vmem:[%s325 + $0x1a8] sm:$0xff] %v2336
        %2401 = vst [vmem:[%s325 + $0x1b0] sm:$0xff] %v2337
        %2402 = vst [vmem:[%s325 + $0x1b8] sm:$0xff] %v2338
        %2403 = vst [vmem:[%s325 + $0x1c0] sm:$0xff] %v2339
        %2404 = vst [vmem:[%s325 + $0x1c8] sm:$0xff] %v2340
        %2405 = vst [vmem:[%s325 + $0x1d0] sm:$0xff] %v2341
        %2406 = vst [vmem:[%s325 + $0x1d8] sm:$0xff] %v2342
        %2407 = vst [vmem:[%s325 + $0x1e0] sm:$0xff] %v2343
        %2408 = vst [vmem:[%s325 + $0x1e8] sm:$0xff] %v2344
        %2409 = vst [vmem:[%s325 + $0x1f0] sm:$0xff] %v2345
        %2410 = vst [vmem:[%s325 + $0x1f8] sm:$0xff] %v2346
        %s2411 = sand.u32 %s185, 1
        %s2412 = scalar_lea.sflag [#allocation4], %s2411
        %s2413 = sand.u32 %s185, 1
        %s2414 = smul.addr %s2413, 512
        %s2415 = scalar_lea.vmem [#allocation8], %s2414
        // Predicated region
        $region61: #{tpu_custom_call.1} parent=47 // pred_check
          %p2416 = pneg %p195
        $region62: #{tpu_custom_call.1} parent=47 // pred_check_branch
          %2418 = sbr.rel (%p2416) target = $region64
        $region63: #{tpu_custom_call.1} parent=47 // pred_region
          %s2419 = smul.u32 64, %s25
          %s2421 = ssub.s32 8192, 8192
          %2422 = vsyncadd %s2412, %s2421
          %s2423 = smul.addr %s2419, 128
          %s2424 = scalar_lea.hbm %s7, %s2423
          %s2425 = sshll.u32 %s2415, 4
          %s2426 = int_to_ptr.vmem [resolvable:$true] %s2425
          %2431 = dma.vmem_to_hbm [thread:$0]  %s2426, 8192, %s2424, %s2412, 128, 128, 8
        $region64: #{tpu_custom_call.1} parent=47 // pred_fallthru
          _
      $region48: #{tpu_custom_call.1} parent=5 // pred_fallthru
        _
      %p2432 = scmp.le.s32.totalorder 2, %s20
      // Predicated region
      $region65: #{tpu_custom_call.1} parent=5 // pred_check
        %p2433 = pneg %p2432
      $region66: #{tpu_custom_call.1} parent=5 // pred_check_branch
        %2435 = sbr.rel (%p2433) target = $region68
      $region67: #{tpu_custom_call.1} parent=5 // pred_region
        %s2436 = ssub.s32 %s20, 2
        // Predicated region
        $region69: #{tpu_custom_call.1} parent=67 // pred_check
          %p2437 = pneg %p201
        $region70: #{tpu_custom_call.1} parent=67 // pred_check_branch
          %2439 = sbr.rel (%p2437) target = $region72
        $region71: #{tpu_custom_call.1} parent=67 // pred_region
          %s2440 = sand.u32 %s186, 1
          %s2441 = scalar_lea.sflag [#allocation4], %s2440
          %s2442 = sand.u32 %s186, 1
          %s2443 = smul.addr %s2442, 512
          %s2444 = scalar_lea.vmem [#allocation8], %s2443
          %2445 = dma.done %s2441, 8192
        $region72: #{tpu_custom_call.1} parent=67 // pred_fallthru
          _
      $region68: #{tpu_custom_call.1} parent=5 // pred_fallthru
        _
    $region6: #{tpu_custom_call.1} parent=1 // loop_footer
      %s24 = sadd.s32 1, %s20
    $region7: #{tpu_custom_call.1} parent=1 // loop_footer_branch
      %19 = sbr.rel target = $region3
    $region8: #{tpu_custom_call.1} parent=1 // loop_exit
      _
    %2446 = vsyncpa [#allocation3], 1
    %s2447 = scalar_lea.sflag [#allocation3], 1
    %2448 = vsyncpa %s2447, 1
    %2449 = vsyncpa [#allocation6], 1
    %2450 = vsyncpa [#allocation4], 1
    %s2451 = scalar_lea.sflag [#allocation4], 1
    %2452 = vsyncpa %s2451, 1

</llo_original>
